<compile_context>
chip_gen: v7x
topology: tpu7x:2x2x1
jax: 0.10.0
libtpu: 0.0.40
codegen_flags: <defaults>
</compile_context>

<pallas_src>
import functools
import math

import jax
import jax.numpy as jnp
from jax.experimental import pallas as pl
from jax.experimental.pallas import tpu as pltpu


# ---------------------------------------------------------------------------
# Kernel
# ---------------------------------------------------------------------------
def _layernorm(h, gamma, beta, eps):
    mean = jnp.mean(h, axis=-1, keepdims=True)
    var = jnp.mean(jnp.square(h - mean), axis=-1, keepdims=True)
    return (h - mean) * jax.lax.rsqrt(var + eps) * gamma + beta


def _mlp_stack_kernel(x_ref, w1_ref, b1_ref, g1_ref, be1_ref,
                      wh_ref, bh_ref, gh_ref, beh_ref, o_ref,
                      *, batch, hidden, p_fold, layer_N, eps, compute_dtype):
    """fc1 (lane-dense packed Linear + ReLU + LayerNorm) + layer_N fc_h clones.

    Matmul operands are `compute_dtype` (bf16 by default); accumulation is
    always f32 (preferred_element_type); ReLU / LayerNorm are always f32.
    """
    B, H, P = batch, hidden, p_fold
    # fc1: (P*B, D/P) @ (D/P, P*H) -> (P*B, P*H).  The wanted (B, H) result is
    # the sum of the P diagonal blocks (block (p, p) = x_chunk_p @ w_chunk_p);
    # the off-diagonal blocks are free MXU work that buys lane-dense DMA.
    y = jnp.dot(x_ref[...].astype(compute_dtype), w1_ref[...],
                preferred_element_type=jnp.float32)
    h = b1_ref[...]
    for p in range(P):                                   # static unroll, tiny
        h = h + y[p * B:(p + 1) * B, p * H:(p + 1) * H]
    h = jnp.maximum(h, 0.0)                              # ReLU
    h = _layernorm(h, g1_ref[...], be1_ref[...], eps)
    for i in range(layer_N):                             # static unroll
        h = jnp.dot(h.astype(compute_dtype), wh_ref[i],
                    preferred_element_type=jnp.float32) + bh_ref[i]
        h = jnp.maximum(h, 0.0)
        h = _layernorm(h, gh_ref[i], beh_ref[i], eps)
    o_ref[...] = h.astype(o_ref.dtype)


# ---------------------------------------------------------------------------
# One-time parameter preprocessing: fold token_mlp/channel_mlp into fc1 and
# repack the fc1 weight lane-dense.
# ---------------------------------------------------------------------------
def fold_mixer_into_fc1(params, matmul_dtype=jnp.bfloat16, lane_pack=True):
    """Fold the two 60x60 mixer Linears into fc1 (exact algebra), then repack
    w1_eff lane-dense: split K into P chunks concatenated along N so the last
    dim is a multiple of 128 lanes (no HBM/VMEM lane padding)."""
    HI = jax.lax.Precision.HIGHEST
    wt, bt, wc, bc = params["wt"], params["bt"], params["wc"], params["bc"]
    w1, b1 = params["w1"], params["b1"]
    D, H = w1.shape
    M = jnp.dot(wt, wc, precision=HI)                                # (60, 60)
    b_mix = jnp.dot(bt, wc, precision=HI) + bc                       # (1, 60)
    w1_3 = w1.reshape(D // 60, 60, H)                                # (C*60, 60, H)
    w1_eff = jnp.einsum("jk,nkh->njh", M, w1_3, precision=HI).reshape(D, H)
    b1_eff = b1 + jnp.dot(b_mix, w1_3.sum(axis=0), precision=HI)     # (1, H)

    P = 1
    if lane_pack and H % 128 != 0:
        P = 128 // math.gcd(H, 128)
        if D % P != 0:
            P = 1
    Dp = D // P
    w1_packed = jnp.concatenate(
        [w1_eff[p * Dp:(p + 1) * Dp] for p in range(P)], axis=1)     # (D/P, P*H)

    return {
        "w1": w1_packed.astype(matmul_dtype),
        "b1": b1_eff.astype(jnp.float32),
        "g1": params["g1"], "be1": params["be1"],
        "wh": params["wh"].astype(matmul_dtype),
        "bh": params["bh"], "gh": params["gh"], "beh": params["beh"],
    }


# ---------------------------------------------------------------------------
# Wrapper: single grid-less pallas_call
# ---------------------------------------------------------------------------
def _hbm_tiled_bytes(shape, dtype):
    """HBM bytes for XLA's tiled layout (last dim -> 128 lanes; second-to-last
    -> 8/16/32 sublanes for 4/2/1-byte dtypes)."""
    item = jnp.dtype(dtype).itemsize
    dims = list(shape) if len(shape) else [1]
    dims[-1] = -(-dims[-1] // 128) * 128
    if len(dims) >= 2:
        sub = {4: 8, 2: 16, 1: 32}.get(item, 8)
        dims[-2] = -(-dims[-2] // sub) * sub
    n = 1
    for d in dims:
        n *= int(d)
    return n * item


def mixer_layer_forward(x, folded, batch, layer_N, eps=1e-5):
    B = batch
    H = folded["b1"].shape[-1]
    Dp, PH = folded["w1"].shape
    P = PH // H
    D = Dp * P
    x = x.reshape(B, D).astype(jnp.float32)
    # Layout plumbing only (one tiny wrapper-side transpose, ~57 KB): stack
    # the P K-chunks of x along M so the kernel's single fc1 matmul is
    # (P*B, D/P) @ (D/P, P*H) with a lane-dense RHS.
    if P > 1:
        x = x.reshape(B, P, Dp).transpose(1, 0, 2).reshape(P * B, Dp)

    ins = (x, folded["w1"], folded["b1"], folded["g1"], folded["be1"],
           folded["wh"], folded["bh"], folded["gh"], folded["beh"])
    flops = 2 * (P * B) * Dp * (P * H) + layer_N * 2 * B * H * H
    bytes_accessed = int(sum(_hbm_tiled_bytes(a.shape, a.dtype) for a in ins)
                         + _hbm_tiled_bytes((B, H), jnp.float32))
    cost = pl.CostEstimate(flops=int(flops),
                           transcendentals=(layer_N + 1) * B,   # rsqrt per LN row
                           bytes_accessed=bytes_accessed)

    vmem = pltpu.MemorySpace.VMEM
    kernel = functools.partial(_mlp_stack_kernel, batch=B, hidden=H, p_fold=P,
                               layer_N=layer_N, eps=eps,
                               compute_dtype=folded["w1"].dtype)
    return pl.pallas_call(
        kernel,
        out_shape=jax.ShapeDtypeStruct((B, H), jnp.float32),
        in_specs=[pl.BlockSpec(memory_space=vmem)] * len(ins),
        out_specs=pl.BlockSpec(memory_space=vmem),
        cost_estimate=cost,
    )(*ins)


# ---------------------------------------------------------------------------
# Pure-JAX references
# ---------------------------------------------------------------------------
def reference_forward_module(x, params, batch, layer_N, eps=1e-5, precision=None):
    """Mirrors the PyTorch forward exactly (token_mlp, permutes, channel_mlp, MLP)."""
    x4 = x.reshape(batch, -1, 60, 60)
    y = jnp.matmul(x4, params["wt"], precision=precision) + params["bt"][0]
    y = jnp.transpose(y, (0, 2, 1, 3))
    y = jnp.matmul(y, params["wc"], precision=precision) + params["bc"][0]
    y = jnp.transpose(y, (0, 2, 1, 3))
    y = y.reshape(batch, -1)
    h = jnp.maximum(jnp.dot(y, params["w1"], precision=precision) + params["b1"][0], 0.0)
    h = _layernorm(h, params["g1"][0], params["be1"][0], eps)
    for i in range(layer_N):
        h = jnp.maximum(jnp.dot(h, params["wh"][i], precision=precision)
                        + params["bh"][i, 0], 0.0)
        h = _layernorm(h, params["gh"][i, 0], params["beh"][i, 0], eps)
    return h


def reference_forward_folded(x, folded, batch, layer_N, eps=1e-5, precision=None):
    """Mirrors the kernel math exactly (same packed weights, casts, chunk sums)."""
    cd = folded["w1"].dtype
    H = folded["b1"].shape[-1]
    Dp, PH = folded["w1"].shape
    P = PH // H
    D = Dp * P
    xs = x.reshape(batch, D)
    if P > 1:
        xs = xs.reshape(batch, P, Dp).transpose(1, 0, 2).reshape(P * batch, Dp)
    y = jnp.dot(xs.astype(cd), folded["w1"],
                preferred_element_type=jnp.float32, precision=precision)
    h = folded["b1"]
    for p in range(P):
        h = h + y[p * batch:(p + 1) * batch, p * H:(p + 1) * H]
    h = jnp.maximum(h, 0.0)
    h = _layernorm(h, folded["g1"], folded["be1"], eps)
    for i in range(layer_N):
        h = jnp.dot(h.astype(cd), folded["wh"][i],
                    preferred_element_type=jnp.float32, precision=precision) + folded["bh"][i]
        h = jnp.maximum(h, 0.0)
        h = _layernorm(h, folded["gh"][i], folded["beh"][i], eps)
    return h


# ---------------------------------------------------------------------------
# Deterministic parameter construction (synthetic; matches module shapes)
# ---------------------------------------------------------------------------
def make_params(key, input_dim, hidden_size, layer_N):
    ks = jax.random.split(key, 4)
    scale = 0.05
    # Linear weights stored pre-transposed as (in, out): y = x @ W + b
    return {
        "wt": scale * jax.random.normal(ks[0], (60, 60), jnp.float32),
        "bt": jnp.zeros((1, 60), jnp.float32),
        "wc": scale * jax.random.normal(ks[1], (60, 60), jnp.float32),
        "bc": jnp.zeros((1, 60), jnp.float32),
        "w1": scale * jax.random.normal(ks[2], (input_dim, hidden_size), jnp.float32),
        "b1": jnp.zeros((1, hidden_size), jnp.float32),
        "g1": jnp.ones((1, hidden_size), jnp.float32),
        "be1": jnp.zeros((1, hidden_size), jnp.float32),
        "wh": scale * jax.random.normal(ks[3], (layer_N, hidden_size, hidden_size),
                                        jnp.float32),
        "bh": jnp.zeros((layer_N, 1, hidden_size), jnp.float32),
        "gh": jnp.ones((layer_N, 1, hidden_size), jnp.float32),
        "beh": jnp.zeros((layer_N, 1, hidden_size), jnp.float32),
    }


if __name__ == "__main__":
    batch = 2
    C = 2                        # number of 60x60 "channels" in the view
    input_dim = C * 60 * 60      # 7200 (60x60 is hard-coded in the module)
    hidden_size = 64
    layer_N = 2

    key = jax.random.PRNGKey(0)
    kx, kp = jax.random.split(key)
    x = jax.random.normal(kx, (batch, input_dim), jnp.float32)
    params = make_params(kp, input_dim, hidden_size, layer_N)

    HI = jax.lax.Precision.HIGHEST

    # (a) Algebra check (pure JAX, full-precision matmuls): the mixer->fc1
    #     fold + lane-dense repack reproduce the module-order forward
    #     (token_mlp, permute, channel_mlp, permute, reshape, fc1, fc_h loop).
    folded_f32 = fold_mixer_into_fc1(params, jnp.float32)
    ref_module = reference_forward_module(x, params, batch, layer_N, precision=HI)
    ref_folded_hi = reference_forward_folded(x, folded_f32, batch, layer_N, precision=HI)
    assert jnp.allclose(ref_folded_hi, ref_module, rtol=1e-3, atol=1e-3), \
        "mixer->fc1 fold / lane-dense repack does not match module-order forward"

    # (b) Default bf16-weight kernel (recommended path on v5e/v6e/v7x) vs. the
    #     mirrored mixed-precision reference (same packed weights and casts).
    folded_bf16 = fold_mixer_into_fc1(params)            # default: bf16 matmul dtype
    out_bf = jax.block_until_ready(mixer_layer_forward(x, folded_bf16, batch, layer_N))
    ref_bf = reference_forward_folded(x, folded_bf16, batch, layer_N)
    assert out_bf.shape == (batch, hidden_size)
    assert jnp.allclose(out_bf, ref_bf, rtol=2e-3, atol=2e-3), \
        "bf16 kernel mismatch vs reference"

    # (c) Optional f32-weight path still runs.  The in-kernel f32 MXU matmul
    #     may use a reduced-precision decomposition at default precision, so
    #     this check is structural (post-LayerNorm values are O(1)).
    out_f32 = jax.block_until_ready(mixer_layer_forward(x, folded_f32, batch, layer_N))
    ref_f32 = reference_forward_folded(x, folded_f32, batch, layer_N, precision=HI)
    assert out_f32.shape == (batch, hidden_size)
    assert jnp.allclose(out_f32, ref_f32, rtol=2e-2, atol=2e-2), \
        "f32 kernel mismatch vs reference"

    print("KERNEL_OK")
</pallas_src>

<mosaic_0001>
module attributes {stable_mosaic.version = 11 : i64} {
  func.func @_mlp_stack_kernel(%arg0: memref<4x3600xf32, #tpu.memory_space<vmem>>, %arg1: memref<3600x128xbf16, #tpu.memory_space<vmem>>, %arg2: memref<1x64xf32, #tpu.memory_space<vmem>>, %arg3: memref<1x64xf32, #tpu.memory_space<vmem>>, %arg4: memref<1x64xf32, #tpu.memory_space<vmem>>, %arg5: memref<2x64x64xbf16, #tpu.memory_space<vmem>>, %arg6: memref<2x1x64xf32, #tpu.memory_space<vmem>>, %arg7: memref<2x1x64xf32, #tpu.memory_space<vmem>>, %arg8: memref<2x1x64xf32, #tpu.memory_space<vmem>>, %arg9: memref<2x64xf32, #tpu.memory_space<vmem>>) attributes {dimension_semantics = [], scalar_prefetch = 0 : i64, scratch_operands = 0 : i64, tpu.core_type = #tpu.core_type<tc>} {
    %c0 = arith.constant 0 : index
    %c0_0 = arith.constant 0 : index
    %0 = vector.load %arg0[%c0, %c0_0] : memref<4x3600xf32, #tpu.memory_space<vmem>>, vector<4x3600xf32>
    %1 = arith.truncf %0 : vector<4x3600xf32> to vector<4x3600xbf16>
    %c0_1 = arith.constant 0 : index
    %c0_2 = arith.constant 0 : index
    %2 = vector.load %arg1[%c0_1, %c0_2] : memref<3600x128xbf16, #tpu.memory_space<vmem>>, vector<3600x128xbf16>
    %cst = arith.constant dense<0.000000e+00> : vector<4x128xf32>
    %3 = tpu.matmul %1, %2, %cst {dimension_numbers = #tpu.dot_dimension_numbers<[1], [0], [0], [1], [0, 0, 1, 1], [], []>} : vector<4x3600xbf16>, vector<3600x128xbf16>, vector<4x128xf32> -> vector<4x128xf32>
    %c0_3 = arith.constant 0 : index
    %c0_4 = arith.constant 0 : index
    %4 = vector.load %arg2[%c0_3, %c0_4] : memref<1x64xf32, #tpu.memory_space<vmem>>, vector<1x64xf32>
    %5 = vector.extract_strided_slice %3 {offsets = [0, 0], sizes = [2, 64], strides = [1, 1]} : vector<4x128xf32> to vector<2x64xf32>
    %6 = vector.broadcast %4 : vector<1x64xf32> to vector<2x64xf32>
    %7 = arith.addf %6, %5 : vector<2x64xf32>
    %8 = vector.extract_strided_slice %3 {offsets = [2, 64], sizes = [2, 64], strides = [1, 1]} : vector<4x128xf32> to vector<2x64xf32>
    %9 = arith.addf %7, %8 : vector<2x64xf32>
    %cst_5 = arith.constant 0.000000e+00 : f32
    %10 = vector.broadcast %cst_5 : f32 to vector<2x64xf32>
    %11 = arith.maximumf %9, %10 : vector<2x64xf32>
    %c0_6 = arith.constant 0 : index
    %c0_7 = arith.constant 0 : index
    %12 = vector.load %arg3[%c0_6, %c0_7] : memref<1x64xf32, #tpu.memory_space<vmem>>, vector<1x64xf32>
    %c0_8 = arith.constant 0 : index
    %c0_9 = arith.constant 0 : index
    %13 = vector.load %arg4[%c0_8, %c0_9] : memref<1x64xf32, #tpu.memory_space<vmem>>, vector<1x64xf32>
    %cst_10 = arith.constant dense<0.000000e+00> : vector<2xf32>
    %14 = vector.multi_reduction <add>, %11, %cst_10 [1] : vector<2x64xf32> to vector<2xf32>
    %15 = vector.shape_cast %14 : vector<2xf32> to vector<2x1xf32>
    %cst_11 = arith.constant 6.400000e+01 : f32
    %16 = vector.broadcast %cst_11 : f32 to vector<2x1xf32>
    %17 = arith.divf %15, %16 : vector<2x1xf32>
    %18 = vector.broadcast %17 : vector<2x1xf32> to vector<2x64xf32>
    %19 = arith.subf %11, %18 : vector<2x64xf32>
    %20 = arith.mulf %19, %19 : vector<2x64xf32>
    %cst_12 = arith.constant dense<0.000000e+00> : vector<2xf32>
    %21 = vector.multi_reduction <add>, %20, %cst_12 [1] : vector<2x64xf32> to vector<2xf32>
    %22 = vector.shape_cast %21 : vector<2xf32> to vector<2x1xf32>
    %cst_13 = arith.constant 6.400000e+01 : f32
    %23 = vector.broadcast %cst_13 : f32 to vector<2x1xf32>
    %24 = arith.divf %22, %23 : vector<2x1xf32>
    %25 = vector.broadcast %17 : vector<2x1xf32> to vector<2x64xf32>
    %26 = arith.subf %11, %25 : vector<2x64xf32>
    %cst_14 = arith.constant 9.99999974E-6 : f32
    %27 = vector.broadcast %cst_14 : f32 to vector<2x1xf32>
    %28 = arith.addf %24, %27 : vector<2x1xf32>
    %29 = math.rsqrt %28 : vector<2x1xf32>
    %30 = vector.broadcast %29 : vector<2x1xf32> to vector<2x64xf32>
    %31 = arith.mulf %26, %30 : vector<2x64xf32>
    %32 = vector.broadcast %12 : vector<1x64xf32> to vector<2x64xf32>
    %33 = arith.mulf %31, %32 : vector<2x64xf32>
    %34 = vector.broadcast %13 : vector<1x64xf32> to vector<2x64xf32>
    %35 = arith.addf %33, %34 : vector<2x64xf32>
    %36 = arith.truncf %35 : vector<2x64xf32> to vector<2x64xbf16>
    %c0_15 = arith.constant 0 : index
    %c0_16 = arith.constant 0 : index
    %c0_17 = arith.constant 0 : index
    %37 = vector.load %arg5[%c0_15, %c0_16, %c0_17] : memref<2x64x64xbf16, #tpu.memory_space<vmem>>, vector<1x64x64xbf16>
    %38 = vector.shape_cast %37 : vector<1x64x64xbf16> to vector<64x64xbf16>
    %cst_18 = arith.constant dense<0.000000e+00> : vector<2x64xf32>
    %39 = tpu.matmul %36, %38, %cst_18 {dimension_numbers = #tpu.dot_dimension_numbers<[1], [0], [0], [1], [0, 0, 1, 1], [], []>} : vector<2x64xbf16>, vector<64x64xbf16>, vector<2x64xf32> -> vector<2x64xf32>
    %c0_19 = arith.constant 0 : index
    %c0_20 = arith.constant 0 : index
    %c0_21 = arith.constant 0 : index
    %40 = vector.load %arg6[%c0_19, %c0_20, %c0_21] : memref<2x1x64xf32, #tpu.memory_space<vmem>>, vector<1x1x64xf32>
    %41 = vector.shape_cast %40 : vector<1x1x64xf32> to vector<1x64xf32>
    %42 = vector.broadcast %41 : vector<1x64xf32> to vector<2x64xf32>
    %43 = arith.addf %39, %42 : vector<2x64xf32>
    %cst_22 = arith.constant 0.000000e+00 : f32
    %44 = vector.broadcast %cst_22 : f32 to vector<2x64xf32>
    %45 = arith.maximumf %43, %44 : vector<2x64xf32>
    %c0_23 = arith.constant 0 : index
    %c0_24 = arith.constant 0 : index
    %c0_25 = arith.constant 0 : index
    %46 = vector.load %arg7[%c0_23, %c0_24, %c0_25] : memref<2x1x64xf32, #tpu.memory_space<vmem>>, vector<1x1x64xf32>
    %47 = vector.shape_cast %46 : vector<1x1x64xf32> to vector<1x64xf32>
    %c0_26 = arith.constant 0 : index
    %c0_27 = arith.constant 0 : index
    %c0_28 = arith.constant 0 : index
    %48 = vector.load %arg8[%c0_26, %c0_27, %c0_28] : memref<2x1x64xf32, #tpu.memory_space<vmem>>, vector<1x1x64xf32>
    %49 = vector.shape_cast %48 : vector<1x1x64xf32> to vector<1x64xf32>
    %cst_29 = arith.constant dense<0.000000e+00> : vector<2xf32>
    %50 = vector.multi_reduction <add>, %45, %cst_29 [1] : vector<2x64xf32> to vector<2xf32>
    %51 = vector.shape_cast %50 : vector<2xf32> to vector<2x1xf32>
    %cst_30 = arith.constant 6.400000e+01 : f32
    %52 = vector.broadcast %cst_30 : f32 to vector<2x1xf32>
    %53 = arith.divf %51, %52 : vector<2x1xf32>
    %54 = vector.broadcast %53 : vector<2x1xf32> to vector<2x64xf32>
    %55 = arith.subf %45, %54 : vector<2x64xf32>
    %56 = arith.mulf %55, %55 : vector<2x64xf32>
    %cst_31 = arith.constant dense<0.000000e+00> : vector<2xf32>
    %57 = vector.multi_reduction <add>, %56, %cst_31 [1] : vector<2x64xf32> to vector<2xf32>
    %58 = vector.shape_cast %57 : vector<2xf32> to vector<2x1xf32>
    %cst_32 = arith.constant 6.400000e+01 : f32
    %59 = vector.broadcast %cst_32 : f32 to vector<2x1xf32>
    %60 = arith.divf %58, %59 : vector<2x1xf32>
    %61 = vector.broadcast %53 : vector<2x1xf32> to vector<2x64xf32>
    %62 = arith.subf %45, %61 : vector<2x64xf32>
    %cst_33 = arith.constant 9.99999974E-6 : f32
    %63 = vector.broadcast %cst_33 : f32 to vector<2x1xf32>
    %64 = arith.addf %60, %63 : vector<2x1xf32>
    %65 = math.rsqrt %64 : vector<2x1xf32>
    %66 = vector.broadcast %65 : vector<2x1xf32> to vector<2x64xf32>
    %67 = arith.mulf %62, %66 : vector<2x64xf32>
    %68 = vector.broadcast %47 : vector<1x64xf32> to vector<2x64xf32>
    %69 = arith.mulf %67, %68 : vector<2x64xf32>
    %70 = vector.broadcast %49 : vector<1x64xf32> to vector<2x64xf32>
    %71 = arith.addf %69, %70 : vector<2x64xf32>
    %72 = arith.truncf %71 : vector<2x64xf32> to vector<2x64xbf16>
    %c1 = arith.constant 1 : index
    %c0_34 = arith.constant 0 : index
    %c0_35 = arith.constant 0 : index
    %73 = vector.load %arg5[%c1, %c0_34, %c0_35] : memref<2x64x64xbf16, #tpu.memory_space<vmem>>, vector<1x64x64xbf16>
    %74 = vector.shape_cast %73 : vector<1x64x64xbf16> to vector<64x64xbf16>
    %cst_36 = arith.constant dense<0.000000e+00> : vector<2x64xf32>
    %75 = tpu.matmul %72, %74, %cst_36 {dimension_numbers = #tpu.dot_dimension_numbers<[1], [0], [0], [1], [0, 0, 1, 1], [], []>} : vector<2x64xbf16>, vector<64x64xbf16>, vector<2x64xf32> -> vector<2x64xf32>
    %c1_37 = arith.constant 1 : index
    %c0_38 = arith.constant 0 : index
    %c0_39 = arith.constant 0 : index
    %76 = vector.load %arg6[%c1_37, %c0_38, %c0_39] : memref<2x1x64xf32, #tpu.memory_space<vmem>>, vector<1x1x64xf32>
    %77 = vector.shape_cast %76 : vector<1x1x64xf32> to vector<1x64xf32>
    %78 = vector.broadcast %77 : vector<1x64xf32> to vector<2x64xf32>
    %79 = arith.addf %75, %78 : vector<2x64xf32>
    %cst_40 = arith.constant 0.000000e+00 : f32
    %80 = vector.broadcast %cst_40 : f32 to vector<2x64xf32>
    %81 = arith.maximumf %79, %80 : vector<2x64xf32>
    %c1_41 = arith.constant 1 : index
    %c0_42 = arith.constant 0 : index
    %c0_43 = arith.constant 0 : index
    %82 = vector.load %arg7[%c1_41, %c0_42, %c0_43] : memref<2x1x64xf32, #tpu.memory_space<vmem>>, vector<1x1x64xf32>
    %83 = vector.shape_cast %82 : vector<1x1x64xf32> to vector<1x64xf32>
    %c1_44 = arith.constant 1 : index
    %c0_45 = arith.constant 0 : index
    %c0_46 = arith.constant 0 : index
    %84 = vector.load %arg8[%c1_44, %c0_45, %c0_46] : memref<2x1x64xf32, #tpu.memory_space<vmem>>, vector<1x1x64xf32>
    %85 = vector.shape_cast %84 : vector<1x1x64xf32> to vector<1x64xf32>
    %cst_47 = arith.constant dense<0.000000e+00> : vector<2xf32>
    %86 = vector.multi_reduction <add>, %81, %cst_47 [1] : vector<2x64xf32> to vector<2xf32>
    %87 = vector.shape_cast %86 : vector<2xf32> to vector<2x1xf32>
    %cst_48 = arith.constant 6.400000e+01 : f32
    %88 = vector.broadcast %cst_48 : f32 to vector<2x1xf32>
    %89 = arith.divf %87, %88 : vector<2x1xf32>
    %90 = vector.broadcast %89 : vector<2x1xf32> to vector<2x64xf32>
    %91 = arith.subf %81, %90 : vector<2x64xf32>
    %92 = arith.mulf %91, %91 : vector<2x64xf32>
    %cst_49 = arith.constant dense<0.000000e+00> : vector<2xf32>
    %93 = vector.multi_reduction <add>, %92, %cst_49 [1] : vector<2x64xf32> to vector<2xf32>
    %94 = vector.shape_cast %93 : vector<2xf32> to vector<2x1xf32>
    %cst_50 = arith.constant 6.400000e+01 : f32
    %95 = vector.broadcast %cst_50 : f32 to vector<2x1xf32>
    %96 = arith.divf %94, %95 : vector<2x1xf32>
    %97 = vector.broadcast %89 : vector<2x1xf32> to vector<2x64xf32>
    %98 = arith.subf %81, %97 : vector<2x64xf32>
    %cst_51 = arith.constant 9.99999974E-6 : f32
    %99 = vector.broadcast %cst_51 : f32 to vector<2x1xf32>
    %100 = arith.addf %96, %99 : vector<2x1xf32>
    %101 = math.rsqrt %100 : vector<2x1xf32>
    %102 = vector.broadcast %101 : vector<2x1xf32> to vector<2x64xf32>
    %103 = arith.mulf %98, %102 : vector<2x64xf32>
    %104 = vector.broadcast %83 : vector<1x64xf32> to vector<2x64xf32>
    %105 = arith.mulf %103, %104 : vector<2x64xf32>
    %106 = vector.broadcast %85 : vector<1x64xf32> to vector<2x64xf32>
    %107 = arith.addf %105, %106 : vector<2x64xf32>
    %c0_52 = arith.constant 0 : index
    %c0_53 = arith.constant 0 : index
    %108 = vector.load %arg9[%c0_52, %c0_53] : memref<2x64xf32, #tpu.memory_space<vmem>>, vector<2x64xf32>
    tpu.vector_store %arg9[%c0_52, %c0_53], %107 {strides = array<i32>} : memref<2x64xf32, #tpu.memory_space<vmem>>, vector<2x64xf32>,
    return
  }
}

</mosaic_0001>

<llo_original>
// kernel: tpu_custom_call.1
$region0: #{tpu_custom_call.1}
  #allocation0 [shape = 'u32[]', space=smem, size = 0x4, offset = 0x4, fixed_abs, tag = 'smem constant byte address 0x4 - core index']
  #allocation1 [shape = 'u32[144,128]{1,0:T(1,128)}', space=vmem, size = 0x12000, scoped, tag = 'internal scratch']
  %s0 = inlined_call_operand.hbm [shape: f32[4,3600], index: 0, kind: input, shape index: {}]
  %s1 = inlined_call_operand.hbm [shape: bf16[3600,128], index: 1, kind: input, shape index: {}]
  %s2 = inlined_call_operand.vmem [shape: f32[1,64], index: 2, kind: input, shape index: {}]
  %s3 = inlined_call_operand.vmem [shape: f32[1,64], index: 3, kind: input, shape index: {}]
  %s4 = inlined_call_operand.vmem [shape: f32[1,64], index: 4, kind: input, shape index: {}]
  %s5 = inlined_call_operand.hbm [shape: bf16[2,64,64], index: 5, kind: input, shape index: {}]
  %s6 = inlined_call_operand.vmem [shape: f32[2,1,64], index: 6, kind: input, shape index: {}]
  %s7 = inlined_call_operand.vmem [shape: f32[2,1,64], index: 7, kind: input, shape index: {}]
  %s8 = inlined_call_operand.vmem [shape: f32[2,1,64], index: 8, kind: input, shape index: {}]
  %s9 = inlined_call_operand.hbm [shape: f32[2,64], index: 9, kind: output, shape index: {}]
  %s10 = sld [smem:[#allocation0]]
  $region58: #{tpu_custom_call.1} parent=0
    _
  %s12 = ssub.s32 1, %s10
  %s13 = scalar_select 0, %s12, %s10
  $region1: #{tpu_custom_call.1} parent=0
    #allocation2 [shape = 'u8[59392]{0}', space=vmem, size = 0xe800, scoped, tag = 'input window, operand 0, single buffered']
    #allocation3 [shape = 's32[1]{0}', space=sflag, size = 0x4, scoped, tag = 'scoped memory for tpu_custom_call.1']
    #allocation4 [shape = 's32[1]{0}', space=sflag, size = 0x4, scoped, tag = 'scoped memory for tpu_custom_call.1']
    #allocation5 [shape = 'u8[921600]{0}', space=vmem, size = 0xe1000, scoped, tag = 'input window, operand 1, single buffered']
    #allocation6 [shape = 's32[1]{0}', space=sflag, size = 0x4, scoped, tag = 'scoped memory for tpu_custom_call.1']
    #allocation7 [shape = 'u8[32768]{0}', space=vmem, size = 0x8000, scoped, tag = 'input window, operand 5, single buffered']
    #allocation8 [shape = 'u8[1024]{0}', space=vmem, size = 0x400, scoped, tag = 'output window, operand 0, single buffered']
    %14 = vsyncpa [#allocation3], 0
    %15 = vsyncpa [#allocation6], 0
    %16 = vsyncpa [#allocation4], 0
    // Predicated region
    $region2: #{tpu_custom_call.1} parent=1 // pred_check
      _
    $region3: #{tpu_custom_call.1} parent=1 // pred_check_branch
      %18 = sbr.rel (0) target = $region5
    $region4: #{tpu_custom_call.1} parent=1 // pred_region
      %s20 = ssub.s32 1856, 1856
      %21 = vsyncadd [#allocation3], %s20
      %s23 = sshll.u32 [#allocation2], 4
      %s24 = int_to_ptr.vmem [resolvable:$true] %s23
      %26 = dma.hbm_to_vmem [thread:$0]  %s0, 1856, %s24, [#allocation3]
    $region5: #{tpu_custom_call.1} parent=1 // pred_fallthru
      _
    // Predicated region
    $region6: #{tpu_custom_call.1} parent=1 // pred_check
      _
    $region7: #{tpu_custom_call.1} parent=1 // pred_check_branch
      %28 = sbr.rel (0) target = $region9
    $region8: #{tpu_custom_call.1} parent=1 // pred_region
      %s30 = ssub.s32 28800, 28800
      %31 = vsyncadd [#allocation6], %s30
      %s32 = sshll.u32 [#allocation5], 4
      %s33 = int_to_ptr.vmem [resolvable:$true] %s32
      %38 = dma.hbm_to_vmem [thread:$0]  %s1, 28800, %s33, [#allocation6], 64, 64, 4
    $region9: #{tpu_custom_call.1} parent=1 // pred_fallthru
      _
    // Predicated region
    $region10: #{tpu_custom_call.1} parent=1 // pred_check
      _
    $region11: #{tpu_custom_call.1} parent=1 // pred_check_branch
      %40 = sbr.rel (0) target = $region13
    $region12: #{tpu_custom_call.1} parent=1 // pred_region
      _
    $region13: #{tpu_custom_call.1} parent=1 // pred_fallthru
      _
    // Predicated region
    $region14: #{tpu_custom_call.1} parent=1 // pred_check
      _
    $region15: #{tpu_custom_call.1} parent=1 // pred_check_branch
      %42 = sbr.rel (0) target = $region17
    $region16: #{tpu_custom_call.1} parent=1 // pred_region
      _
    $region17: #{tpu_custom_call.1} parent=1 // pred_fallthru
      _
    // Predicated region
    $region18: #{tpu_custom_call.1} parent=1 // pred_check
      _
    $region19: #{tpu_custom_call.1} parent=1 // pred_check_branch
      %44 = sbr.rel (0) target = $region21
    $region20: #{tpu_custom_call.1} parent=1 // pred_region
      _
    $region21: #{tpu_custom_call.1} parent=1 // pred_fallthru
      _
    // Predicated region
    $region22: #{tpu_custom_call.1} parent=1 // pred_check
      _
    $region23: #{tpu_custom_call.1} parent=1 // pred_check_branch
      %46 = sbr.rel (0) target = $region25
    $region24: #{tpu_custom_call.1} parent=1 // pred_region
      %s48 = ssub.s32 1024, 1024
      %49 = vsyncadd [#allocation6], %s48
      %s50 = sshll.u32 [#allocation7], 4
      %s51 = int_to_ptr.vmem [resolvable:$true] %s50
      %56 = dma.hbm_to_vmem [thread:$0]  %s5, 1024, %s51, [#allocation6], 64, 64, 4
    $region25: #{tpu_custom_call.1} parent=1 // pred_fallthru
      _
    // Predicated region
    $region26: #{tpu_custom_call.1} parent=1 // pred_check
      _
    $region27: #{tpu_custom_call.1} parent=1 // pred_check_branch
      %58 = sbr.rel (0) target = $region29
    $region28: #{tpu_custom_call.1} parent=1 // pred_region
      _
    $region29: #{tpu_custom_call.1} parent=1 // pred_fallthru
      _
    // Predicated region
    $region30: #{tpu_custom_call.1} parent=1 // pred_check
      _
    $region31: #{tpu_custom_call.1} parent=1 // pred_check_branch
      %60 = sbr.rel (0) target = $region33
    $region32: #{tpu_custom_call.1} parent=1 // pred_region
      _
    $region33: #{tpu_custom_call.1} parent=1 // pred_fallthru
      _
    // Predicated region
    $region34: #{tpu_custom_call.1} parent=1 // pred_check
      _
    $region35: #{tpu_custom_call.1} parent=1 // pred_check_branch
      %62 = sbr.rel (0) target = $region37
    $region36: #{tpu_custom_call.1} parent=1 // pred_region
      _
    $region37: #{tpu_custom_call.1} parent=1 // pred_fallthru
      _
    // Predicated region
    $region38: #{tpu_custom_call.1} parent=1 // pred_check
      _
    $region39: #{tpu_custom_call.1} parent=1 // pred_check_branch
      %64 = sbr.rel (0) target = $region41
    $region40: #{tpu_custom_call.1} parent=1 // pred_region
      %65 = dma.done [#allocation3], 1856
    $region41: #{tpu_custom_call.1} parent=1 // pred_fallthru
      _
    // Predicated region
    $region42: #{tpu_custom_call.1} parent=1 // pred_check
      _
    $region43: #{tpu_custom_call.1} parent=1 // pred_check_branch
      %67 = sbr.rel (0) target = $region45
    $region44: #{tpu_custom_call.1} parent=1 // pred_region
      %68 = dma.done [#allocation6], 28800
    $region45: #{tpu_custom_call.1} parent=1 // pred_fallthru
      _
    // Predicated region
    $region46: #{tpu_custom_call.1} parent=1 // pred_check
      _
    $region47: #{tpu_custom_call.1} parent=1 // pred_check_branch
      %70 = sbr.rel (0) target = $region49
    $region48: #{tpu_custom_call.1} parent=1 // pred_region
      %71 = dma.done [#allocation6], 1024
    $region49: #{tpu_custom_call.1} parent=1 // pred_fallthru
      _
    %v73 = vld [vmem:[#allocation2] sm:$0xff]
    %v74 = vld [vmem:[#allocation2 + $0x8] sm:$0xff]
    %v75 = vld [vmem:[#allocation2 + $0x10] sm:$0xff]
    %v76 = vld [vmem:[#allocation2 + $0x18] sm:$0xff]
    %v77 = vld [vmem:[#allocation2 + $0x20] sm:$0xff]
    %v78 = vld [vmem:[#allocation2 + $0x28] sm:$0xff]
    %v79 = vld [vmem:[#allocation2 + $0x30] sm:$0xff]
    %v80 = vld [vmem:[#allocation2 + $0x38] sm:$0xff]
    %v81 = vld [vmem:[#allocation2 + $0x40] sm:$0xff]
    %v82 = vld [vmem:[#allocation2 + $0x48] sm:$0xff]
    %v83 = vld [vmem:[#allocation2 + $0x50] sm:$0xff]
    %v84 = vld [vmem:[#allocation2 + $0x58] sm:$0xff]
    %v85 = vld [vmem:[#allocation2 + $0x60] sm:$0xff]
    %v86 = vld [vmem:[#allocation2 + $0x68] sm:$0xff]
    %v87 = vld [vmem:[#allocation2 + $0x70] sm:$0xf]
    %v102 = vcombine.high %v73, %v73
    %v103 = vcombine.high %v74, %v74
    %v104 = vcombine.high %v75, %v75
    %v105 = vcombine.high %v76, %v76
    %v106 = vcombine.high %v77, %v77
    %v107 = vcombine.high %v78, %v78
    %v108 = vcombine.high %v79, %v79
    %v109 = vcombine.high %v80, %v80
    %v110 = vcombine.high %v81, %v81
    %v111 = vcombine.high %v82, %v82
    %v112 = vcombine.high %v83, %v83
    %v113 = vcombine.high %v84, %v84
    %v114 = vcombine.high %v85, %v85
    %v115 = vcombine.high %v86, %v86
    %v130 = vpack.c.bf16 %v73, %v73
    %v131 = vpack.c.bf16 %v102, %v102
    %v132 = vpack.c.bf16 %v74, %v74
    %v133 = vpack.c.bf16 %v103, %v103
    %v134 = vpack.c.bf16 %v75, %v75
    %v135 = vpack.c.bf16 %v104, %v104
    %v136 = vpack.c.bf16 %v76, %v76
    %v137 = vpack.c.bf16 %v105, %v105
    %v138 = vpack.c.bf16 %v77, %v77
    %v139 = vpack.c.bf16 %v106, %v106
    %v140 = vpack.c.bf16 %v78, %v78
    %v141 = vpack.c.bf16 %v107, %v107
    %v142 = vpack.c.bf16 %v79, %v79
    %v143 = vpack.c.bf16 %v108, %v108
    %v144 = vpack.c.bf16 %v80, %v80
    %v145 = vpack.c.bf16 %v109, %v109
    %v146 = vpack.c.bf16 %v81, %v81
    %v147 = vpack.c.bf16 %v110, %v110
    %v148 = vpack.c.bf16 %v82, %v82
    %v149 = vpack.c.bf16 %v111, %v111
    %v150 = vpack.c.bf16 %v83, %v83
    %v151 = vpack.c.bf16 %v112, %v112
    %v152 = vpack.c.bf16 %v84, %v84
    %v153 = vpack.c.bf16 %v113, %v113
    %v154 = vpack.c.bf16 %v85, %v85
    %v155 = vpack.c.bf16 %v114, %v114
    %v156 = vpack.c.bf16 %v86, %v86
    %v157 = vpack.c.bf16 %v115, %v115
    %v158 = vpack.c.bf16 %v87, %v87
    %v159 = vld [vmem:[#allocation5] sm:$0xf]
    %v160 = vld [vmem:[#allocation5 + $0x4] sm:$0xf]
    %v161 = vld [vmem:[#allocation5 + $0x8] sm:$0xf]
    %v162 = vld [vmem:[#allocation5 + $0xc] sm:$0xf]
    %v163 = vld [vmem:[#allocation5 + $0x10] sm:$0xf]
    %v164 = vld [vmem:[#allocation5 + $0x14] sm:$0xf]
    %v165 = vld [vmem:[#allocation5 + $0x18] sm:$0xf]
    %v166 = vld [vmem:[#allocation5 + $0x1c] sm:$0xf]
    %v167 = vld [vmem:[#allocation5 + $0x20] sm:$0xf]
    %v168 = vld [vmem:[#allocation5 + $0x24] sm:$0xf]
    %v169 = vld [vmem:[#allocation5 + $0x28] sm:$0xf]
    %v170 = vld [vmem:[#allocation5 + $0x2c] sm:$0xf]
    %v171 = vld [vmem:[#allocation5 + $0x30] sm:$0xf]
    %v172 = vld [vmem:[#allocation5 + $0x34] sm:$0xf]
    %v173 = vld [vmem:[#allocation5 + $0x38] sm:$0xf]
    %v174 = vld [vmem:[#allocation5 + $0x3c] sm:$0xf]
    %v175 = vld [vmem:[#allocation5 + $0x40] sm:$0xf]
    %v176 = vld [vmem:[#allocation5 + $0x44] sm:$0xf]
    %v177 = vld [vmem:[#allocation5 + $0x48] sm:$0xf]
    %v178 = vld [vmem:[#allocation5 + $0x4c] sm:$0xf]
    %v179 = vld [vmem:[#allocation5 + $0x50] sm:$0xf]
    %v180 = vld [vmem:[#allocation5 + $0x54] sm:$0xf]
    %v181 = vld [vmem:[#allocation5 + $0x58] sm:$0xf]
    %v182 = vld [vmem:[#allocation5 + $0x5c] sm:$0xf]
    %v183 = vld [vmem:[#allocation5 + $0x60] sm:$0xf]
    %v184 = vld [vmem:[#allocation5 + $0x64] sm:$0xf]
    %v185 = vld [vmem:[#allocation5 + $0x68] sm:$0xf]
    %v186 = vld [vmem:[#allocation5 + $0x6c] sm:$0xf]
    %v187 = vld [vmem:[#allocation5 + $0x70] sm:$0xf]
    %v188 = vld [vmem:[#allocation5 + $0x74] sm:$0xf]
    %v189 = vld [vmem:[#allocation5 + $0x78] sm:$0xf]
    %v190 = vld [vmem:[#allocation5 + $0x7c] sm:$0xf]
    %v191 = vld [vmem:[#allocation5 + $0x80] sm:$0xf]
    %v192 = vld [vmem:[#allocation5 + $0x84] sm:$0xf]
    %v193 = vld [vmem:[#allocation5 + $0x88] sm:$0xf]
    %v194 = vld [vmem:[#allocation5 + $0x8c] sm:$0xf]
    %v195 = vld [vmem:[#allocation5 + $0x90] sm:$0xf]
    %v196 = vld [vmem:[#allocation5 + $0x94] sm:$0xf]
    %v197 = vld [vmem:[#allocation5 + $0x98] sm:$0xf]
    %v198 = vld [vmem:[#allocation5 + $0x9c] sm:$0xf]
    %v199 = vld [vmem:[#allocation5 + $0xa0] sm:$0xf]
    %v200 = vld [vmem:[#allocation5 + $0xa4] sm:$0xf]
    %v201 = vld [vmem:[#allocation5 + $0xa8] sm:$0xf]
    %v202 = vld [vmem:[#allocation5 + $0xac] sm:$0xf]
    %v203 = vld [vmem:[#allocation5 + $0xb0] sm:$0xf]
    %v204 = vld [vmem:[#allocation5 + $0xb4] sm:$0xf]
    %v205 = vld [vmem:[#allocation5 + $0xb8] sm:$0xf]
    %v206 = vld [vmem:[#allocation5 + $0xbc] sm:$0xf]
    %v207 = vld [vmem:[#allocation5 + $0xc0] sm:$0xf]
    %v208 = vld [vmem:[#allocation5 + $0xc4] sm:$0xf]
    %v209 = vld [vmem:[#allocation5 + $0xc8] sm:$0xf]
    %v210 = vld [vmem:[#allocation5 + $0xcc] sm:$0xf]
    %v211 = vld [vmem:[#allocation5 + $0xd0] sm:$0xf]
    %v212 = vld [vmem:[#allocation5 + $0xd4] sm:$0xf]
    %v213 = vld [vmem:[#allocation5 + $0xd8] sm:$0xf]
    %v214 = vld [vmem:[#allocation5 + $0xdc] sm:$0xf]
    %v215 = vld [vmem:[#allocation5 + $0xe0] sm:$0xf]
    %v216 = vld [vmem:[#allocation5 + $0xe4] sm:$0xf]
    %v217 = vld [vmem:[#allocation5 + $0xe8] sm:$0xf]
    %v218 = vld [vmem:[#allocation5 + $0xec] sm:$0xf]
    %v219 = vld [vmem:[#allocation5 + $0xf0] sm:$0xf]
    %v220 = vld [vmem:[#allocation5 + $0xf4] sm:$0xf]
    %v221 = vld [vmem:[#allocation5 + $0xf8] sm:$0xf]
    %v222 = vld [vmem:[#allocation5 + $0xfc] sm:$0xf]
    %v223 = vld [vmem:[#allocation5 + $0x100] sm:$0xf]
    %v224 = vld [vmem:[#allocation5 + $0x104] sm:$0xf]
    %v225 = vld [vmem:[#allocation5 + $0x108] sm:$0xf]
    %v226 = vld [vmem:[#allocation5 + $0x10c] sm:$0xf]
    %v227 = vld [vmem:[#allocation5 + $0x110] sm:$0xf]
    %v228 = vld [vmem:[#allocation5 + $0x114] sm:$0xf]
    %v229 = vld [vmem:[#allocation5 + $0x118] sm:$0xf]
    %v230 = vld [vmem:[#allocation5 + $0x11c] sm:$0xf]
    %v231 = vld [vmem:[#allocation5 + $0x120] sm:$0xf]
    %v232 = vld [vmem:[#allocation5 + $0x124] sm:$0xf]
    %v233 = vld [vmem:[#allocation5 + $0x128] sm:$0xf]
    %v234 = vld [vmem:[#allocation5 + $0x12c] sm:$0xf]
    %v235 = vld [vmem:[#allocation5 + $0x130] sm:$0xf]
    %v236 = vld [vmem:[#allocation5 + $0x134] sm:$0xf]
    %v237 = vld [vmem:[#allocation5 + $0x138] sm:$0xf]
    %v238 = vld [vmem:[#allocation5 + $0x13c] sm:$0xf]
    %v239 = vld [vmem:[#allocation5 + $0x140] sm:$0xf]
    %v240 = vld [vmem:[#allocation5 + $0x144] sm:$0xf]
    %v241 = vld [vmem:[#allocation5 + $0x148] sm:$0xf]
    %v242 = vld [vmem:[#allocation5 + $0x14c] sm:$0xf]
    %v243 = vld [vmem:[#allocation5 + $0x150] sm:$0xf]
    %v244 = vld [vmem:[#allocation5 + $0x154] sm:$0xf]
    %v245 = vld [vmem:[#allocation5 + $0x158] sm:$0xf]
    %v246 = vld [vmem:[#allocation5 + $0x15c] sm:$0xf]
    %v247 = vld [vmem:[#allocation5 + $0x160] sm:$0xf]
    %v248 = vld [vmem:[#allocation5 + $0x164] sm:$0xf]
    %v249 = vld [vmem:[#allocation5 + $0x168] sm:$0xf]
    %v250 = vld [vmem:[#allocation5 + $0x16c] sm:$0xf]
    %v251 = vld [vmem:[#allocation5 + $0x170] sm:$0xf]
    %v252 = vld [vmem:[#allocation5 + $0x174] sm:$0xf]
    %v253 = vld [vmem:[#allocation5 + $0x178] sm:$0xf]
    %v254 = vld [vmem:[#allocation5 + $0x17c] sm:$0xf]
    %v255 = vld [vmem:[#allocation5 + $0x180] sm:$0xf]
    %v256 = vld [vmem:[#allocation5 + $0x184] sm:$0xf]
    %v257 = vld [vmem:[#allocation5 + $0x188] sm:$0xf]
    %v258 = vld [vmem:[#allocation5 + $0x18c] sm:$0xf]
    %v259 = vld [vmem:[#allocation5 + $0x190] sm:$0xf]
    %v260 = vld [vmem:[#allocation5 + $0x194] sm:$0xf]
    %v261 = vld [vmem:[#allocation5 + $0x198] sm:$0xf]
    %v262 = vld [vmem:[#allocation5 + $0x19c] sm:$0xf]
    %v263 = vld [vmem:[#allocation5 + $0x1a0] sm:$0xf]
    %v264 = vld [vmem:[#allocation5 + $0x1a4] sm:$0xf]
    %v265 = vld [vmem:[#allocation5 + $0x1a8] sm:$0xf]
    %v266 = vld [vmem:[#allocation5 + $0x1ac] sm:$0xf]
    %v267 = vld [vmem:[#allocation5 + $0x1b0] sm:$0xf]
    %v268 = vld [vmem:[#allocation5 + $0x1b4] sm:$0xf]
    %v269 = vld [vmem:[#allocation5 + $0x1b8] sm:$0xf]
    %v270 = vld [vmem:[#allocation5 + $0x1bc] sm:$0xf]
    %v271 = vld [vmem:[#allocation5 + $0x1c0] sm:$0xf]
    %v272 = vld [vmem:[#allocation5 + $0x1c4] sm:$0xf]
    %v273 = vld [vmem:[#allocation5 + $0x1c8] sm:$0xf]
    %v274 = vld [vmem:[#allocation5 + $0x1cc] sm:$0xf]
    %v275 = vld [vmem:[#allocation5 + $0x1d0] sm:$0xf]
    %v276 = vld [vmem:[#allocation5 + $0x1d4] sm:$0xf]
    %v277 = vld [vmem:[#allocation5 + $0x1d8] sm:$0xf]
    %v278 = vld [vmem:[#allocation5 + $0x1dc] sm:$0xf]
    %v279 = vld [vmem:[#allocation5 + $0x1e0] sm:$0xf]
    %v280 = vld [vmem:[#allocation5 + $0x1e4] sm:$0xf]
    %v281 = vld [vmem:[#allocation5 + $0x1e8] sm:$0xf]
    %v282 = vld [vmem:[#allocation5 + $0x1ec] sm:$0xf]
    %v283 = vld [vmem:[#allocation5 + $0x1f0] sm:$0xf]
    %v284 = vld [vmem:[#allocation5 + $0x1f4] sm:$0xf]
    %v285 = vld [vmem:[#allocation5 + $0x1f8] sm:$0xf]
    %v286 = vld [vmem:[#allocation5 + $0x1fc] sm:$0xf]
    %v287 = vld [vmem:[#allocation5 + $0x200] sm:$0xf]
    %v288 = vld [vmem:[#allocation5 + $0x204] sm:$0xf]
    %v289 = vld [vmem:[#allocation5 + $0x208] sm:$0xf]
    %v290 = vld [vmem:[#allocation5 + $0x20c] sm:$0xf]
    %v291 = vld [vmem:[#allocation5 + $0x210] sm:$0xf]
    %v292 = vld [vmem:[#allocation5 + $0x214] sm:$0xf]
    %v293 = vld [vmem:[#allocation5 + $0x218] sm:$0xf]
    %v294 = vld [vmem:[#allocation5 + $0x21c] sm:$0xf]
    %v295 = vld [vmem:[#allocation5 + $0x220] sm:$0xf]
    %v296 = vld [vmem:[#allocation5 + $0x224] sm:$0xf]
    %v297 = vld [vmem:[#allocation5 + $0x228] sm:$0xf]
    %v298 = vld [vmem:[#allocation5 + $0x22c] sm:$0xf]
    %v299 = vld [vmem:[#allocation5 + $0x230] sm:$0xf]
    %v300 = vld [vmem:[#allocation5 + $0x234] sm:$0xf]
    %v301 = vld [vmem:[#allocation5 + $0x238] sm:$0xf]
    %v302 = vld [vmem:[#allocation5 + $0x23c] sm:$0xf]
    %v303 = vld [vmem:[#allocation5 + $0x240] sm:$0xf]
    %v304 = vld [vmem:[#allocation5 + $0x244] sm:$0xf]
    %v305 = vld [vmem:[#allocation5 + $0x248] sm:$0xf]
    %v306 = vld [vmem:[#allocation5 + $0x24c] sm:$0xf]
    %v307 = vld [vmem:[#allocation5 + $0x250] sm:$0xf]
    %v308 = vld [vmem:[#allocation5 + $0x254] sm:$0xf]
    %v309 = vld [vmem:[#allocation5 + $0x258] sm:$0xf]
    %v310 = vld [vmem:[#allocation5 + $0x25c] sm:$0xf]
    %v311 = vld [vmem:[#allocation5 + $0x260] sm:$0xf]
    %v312 = vld [vmem:[#allocation5 + $0x264] sm:$0xf]
    %v313 = vld [vmem:[#allocation5 + $0x268] sm:$0xf]
    %v314 = vld [vmem:[#allocation5 + $0x26c] sm:$0xf]
    %v315 = vld [vmem:[#allocation5 + $0x270] sm:$0xf]
    %v316 = vld [vmem:[#allocation5 + $0x274] sm:$0xf]
    %v317 = vld [vmem:[#allocation5 + $0x278] sm:$0xf]
    %v318 = vld [vmem:[#allocation5 + $0x27c] sm:$0xf]
    %v319 = vld [vmem:[#allocation5 + $0x280] sm:$0xf]
    %v320 = vld [vmem:[#allocation5 + $0x284] sm:$0xf]
    %v321 = vld [vmem:[#allocation5 + $0x288] sm:$0xf]
    %v322 = vld [vmem:[#allocation5 + $0x28c] sm:$0xf]
    %v323 = vld [vmem:[#allocation5 + $0x290] sm:$0xf]
    %v324 = vld [vmem:[#allocation5 + $0x294] sm:$0xf]
    %v325 = vld [vmem:[#allocation5 + $0x298] sm:$0xf]
    %v326 = vld [vmem:[#allocation5 + $0x29c] sm:$0xf]
    %v327 = vld [vmem:[#allocation5 + $0x2a0] sm:$0xf]
    %v328 = vld [vmem:[#allocation5 + $0x2a4] sm:$0xf]
    %v329 = vld [vmem:[#allocation5 + $0x2a8] sm:$0xf]
    %v330 = vld [vmem:[#allocation5 + $0x2ac] sm:$0xf]
    %v331 = vld [vmem:[#allocation5 + $0x2b0] sm:$0xf]
    %v332 = vld [vmem:[#allocation5 + $0x2b4] sm:$0xf]
    %v333 = vld [vmem:[#allocation5 + $0x2b8] sm:$0xf]
    %v334 = vld [vmem:[#allocation5 + $0x2bc] sm:$0xf]
    %v335 = vld [vmem:[#allocation5 + $0x2c0] sm:$0xf]
    %v336 = vld [vmem:[#allocation5 + $0x2c4] sm:$0xf]
    %v337 = vld [vmem:[#allocation5 + $0x2c8] sm:$0xf]
    %v338 = vld [vmem:[#allocation5 + $0x2cc] sm:$0xf]
    %v339 = vld [vmem:[#allocation5 + $0x2d0] sm:$0xf]
    %v340 = vld [vmem:[#allocation5 + $0x2d4] sm:$0xf]
    %v341 = vld [vmem:[#allocation5 + $0x2d8] sm:$0xf]
    %v342 = vld [vmem:[#allocation5 + $0x2dc] sm:$0xf]
    %v343 = vld [vmem:[#allocation5 + $0x2e0] sm:$0xf]
    %v344 = vld [vmem:[#allocation5 + $0x2e4] sm:$0xf]
    %v345 = vld [vmem:[#allocation5 + $0x2e8] sm:$0xf]
    %v346 = vld [vmem:[#allocation5 + $0x2ec] sm:$0xf]
    %v347 = vld [vmem:[#allocation5 + $0x2f0] sm:$0xf]
    %v348 = vld [vmem:[#allocation5 + $0x2f4] sm:$0xf]
    %v349 = vld [vmem:[#allocation5 + $0x2f8] sm:$0xf]
    %v350 = vld [vmem:[#allocation5 + $0x2fc] sm:$0xf]
    %v351 = vld [vmem:[#allocation5 + $0x300] sm:$0xf]
    %v352 = vld [vmem:[#allocation5 + $0x304] sm:$0xf]
    %v353 = vld [vmem:[#allocation5 + $0x308] sm:$0xf]
    %v354 = vld [vmem:[#allocation5 + $0x30c] sm:$0xf]
    %v355 = vld [vmem:[#allocation5 + $0x310] sm:$0xf]
    %v356 = vld [vmem:[#allocation5 + $0x314] sm:$0xf]
    %v357 = vld [vmem:[#allocation5 + $0x318] sm:$0xf]
    %v358 = vld [vmem:[#allocation5 + $0x31c] sm:$0xf]
    %v359 = vld [vmem:[#allocation5 + $0x320] sm:$0xf]
    %v360 = vld [vmem:[#allocation5 + $0x324] sm:$0xf]
    %v361 = vld [vmem:[#allocation5 + $0x328] sm:$0xf]
    %v362 = vld [vmem:[#allocation5 + $0x32c] sm:$0xf]
    %v363 = vld [vmem:[#allocation5 + $0x330] sm:$0xf]
    %v364 = vld [vmem:[#allocation5 + $0x334] sm:$0xf]
    %v365 = vld [vmem:[#allocation5 + $0x338] sm:$0xf]
    %v366 = vld [vmem:[#allocation5 + $0x33c] sm:$0xf]
    %v367 = vld [vmem:[#allocation5 + $0x340] sm:$0xf]
    %v368 = vld [vmem:[#allocation5 + $0x344] sm:$0xf]
    %v369 = vld [vmem:[#allocation5 + $0x348] sm:$0xf]
    %v370 = vld [vmem:[#allocation5 + $0x34c] sm:$0xf]
    %v371 = vld [vmem:[#allocation5 + $0x350] sm:$0xf]
    %v372 = vld [vmem:[#allocation5 + $0x354] sm:$0xf]
    %v373 = vld [vmem:[#allocation5 + $0x358] sm:$0xf]
    %v374 = vld [vmem:[#allocation5 + $0x35c] sm:$0xf]
    %v375 = vld [vmem:[#allocation5 + $0x360] sm:$0xf]
    %v376 = vld [vmem:[#allocation5 + $0x364] sm:$0xf]
    %v377 = vld [vmem:[#allocation5 + $0x368] sm:$0xf]
    %v378 = vld [vmem:[#allocation5 + $0x36c] sm:$0xf]
    %v379 = vld [vmem:[#allocation5 + $0x370] sm:$0xf]
    %v380 = vld [vmem:[#allocation5 + $0x374] sm:$0xf]
    %v381 = vld [vmem:[#allocation5 + $0x378] sm:$0xf]
    %v382 = vld [vmem:[#allocation5 + $0x37c] sm:$0xf]
    %v383 = vld [vmem:[#allocation5 + $0x380] sm:$0xf]
    %v384 = vld [vmem:[#allocation5 + $0x384] sm:$0xf]
    %v385 = vld [vmem:[#allocation5 + $0x388] sm:$0xf]
    %v386 = vld [vmem:[#allocation5 + $0x38c] sm:$0xf]
    %v387 = vld [vmem:[#allocation5 + $0x390] sm:$0xf]
    %v388 = vld [vmem:[#allocation5 + $0x394] sm:$0xf]
    %v389 = vld [vmem:[#allocation5 + $0x398] sm:$0xf]
    %v390 = vld [vmem:[#allocation5 + $0x39c] sm:$0xf]
    %v391 = vld [vmem:[#allocation5 + $0x3a0] sm:$0xf]
    %v392 = vld [vmem:[#allocation5 + $0x3a4] sm:$0xf]
    %v393 = vld [vmem:[#allocation5 + $0x3a8] sm:$0xf]
    %v394 = vld [vmem:[#allocation5 + $0x3ac] sm:$0xf]
    %v395 = vld [vmem:[#allocation5 + $0x3b0] sm:$0xf]
    %v396 = vld [vmem:[#allocation5 + $0x3b4] sm:$0xf]
    %v397 = vld [vmem:[#allocation5 + $0x3b8] sm:$0xf]
    %v398 = vld [vmem:[#allocation5 + $0x3bc] sm:$0xf]
    %v399 = vld [vmem:[#allocation5 + $0x3c0] sm:$0xf]
    %v400 = vld [vmem:[#allocation5 + $0x3c4] sm:$0xf]
    %v401 = vld [vmem:[#allocation5 + $0x3c8] sm:$0xf]
    %v402 = vld [vmem:[#allocation5 + $0x3cc] sm:$0xf]
    %v403 = vld [vmem:[#allocation5 + $0x3d0] sm:$0xf]
    %v404 = vld [vmem:[#allocation5 + $0x3d4] sm:$0xf]
    %v405 = vld [vmem:[#allocation5 + $0x3d8] sm:$0xf]
    %v406 = vld [vmem:[#allocation5 + $0x3dc] sm:$0xf]
    %v407 = vld [vmem:[#allocation5 + $0x3e0] sm:$0xf]
    %v408 = vld [vmem:[#allocation5 + $0x3e4] sm:$0xf]
    %v409 = vld [vmem:[#allocation5 + $0x3e8] sm:$0xf]
    %v410 = vld [vmem:[#allocation5 + $0x3ec] sm:$0xf]
    %v411 = vld [vmem:[#allocation5 + $0x3f0] sm:$0xf]
    %v412 = vld [vmem:[#allocation5 + $0x3f4] sm:$0xf]
    %v413 = vld [vmem:[#allocation5 + $0x3f8] sm:$0xf]
    %v414 = vld [vmem:[#allocation5 + $0x3fc] sm:$0xf]
    %v415 = vld [vmem:[#allocation5 + $0x400] sm:$0xf]
    %v416 = vld [vmem:[#allocation5 + $0x404] sm:$0xf]
    %v417 = vld [vmem:[#allocation5 + $0x408] sm:$0xf]
    %v418 = vld [vmem:[#allocation5 + $0x40c] sm:$0xf]
    %v419 = vld [vmem:[#allocation5 + $0x410] sm:$0xf]
    %v420 = vld [vmem:[#allocation5 + $0x414] sm:$0xf]
    %v421 = vld [vmem:[#allocation5 + $0x418] sm:$0xf]
    %v422 = vld [vmem:[#allocation5 + $0x41c] sm:$0xf]
    %v423 = vld [vmem:[#allocation5 + $0x420] sm:$0xf]
    %v424 = vld [vmem:[#allocation5 + $0x424] sm:$0xf]
    %v425 = vld [vmem:[#allocation5 + $0x428] sm:$0xf]
    %v426 = vld [vmem:[#allocation5 + $0x42c] sm:$0xf]
    %v427 = vld [vmem:[#allocation5 + $0x430] sm:$0xf]
    %v428 = vld [vmem:[#allocation5 + $0x434] sm:$0xf]
    %v429 = vld [vmem:[#allocation5 + $0x438] sm:$0xf]
    %v430 = vld [vmem:[#allocation5 + $0x43c] sm:$0xf]
    %v431 = vld [vmem:[#allocation5 + $0x440] sm:$0xf]
    %v432 = vld [vmem:[#allocation5 + $0x444] sm:$0xf]
    %v433 = vld [vmem:[#allocation5 + $0x448] sm:$0xf]
    %v434 = vld [vmem:[#allocation5 + $0x44c] sm:$0xf]
    %v435 = vld [vmem:[#allocation5 + $0x450] sm:$0xf]
    %v436 = vld [vmem:[#allocation5 + $0x454] sm:$0xf]
    %v437 = vld [vmem:[#allocation5 + $0x458] sm:$0xf]
    %v438 = vld [vmem:[#allocation5 + $0x45c] sm:$0xf]
    %v439 = vld [vmem:[#allocation5 + $0x460] sm:$0xf]
    %v440 = vld [vmem:[#allocation5 + $0x464] sm:$0xf]
    %v441 = vld [vmem:[#allocation5 + $0x468] sm:$0xf]
    %v442 = vld [vmem:[#allocation5 + $0x46c] sm:$0xf]
    %v443 = vld [vmem:[#allocation5 + $0x470] sm:$0xf]
    %v444 = vld [vmem:[#allocation5 + $0x474] sm:$0xf]
    %v445 = vld [vmem:[#allocation5 + $0x478] sm:$0xf]
    %v446 = vld [vmem:[#allocation5 + $0x47c] sm:$0xf]
    %v447 = vld [vmem:[#allocation5 + $0x480] sm:$0xf]
    %v448 = vld [vmem:[#allocation5 + $0x484] sm:$0xf]
    %v449 = vld [vmem:[#allocation5 + $0x488] sm:$0xf]
    %v450 = vld [vmem:[#allocation5 + $0x48c] sm:$0xf]
    %v451 = vld [vmem:[#allocation5 + $0x490] sm:$0xf]
    %v452 = vld [vmem:[#allocation5 + $0x494] sm:$0xf]
    %v453 = vld [vmem:[#allocation5 + $0x498] sm:$0xf]
    %v454 = vld [vmem:[#allocation5 + $0x49c] sm:$0xf]
    %v455 = vld [vmem:[#allocation5 + $0x4a0] sm:$0xf]
    %v456 = vld [vmem:[#allocation5 + $0x4a4] sm:$0xf]
    %v457 = vld [vmem:[#allocation5 + $0x4a8] sm:$0xf]
    %v458 = vld [vmem:[#allocation5 + $0x4ac] sm:$0xf]
    %v459 = vld [vmem:[#allocation5 + $0x4b0] sm:$0xf]
    %v460 = vld [vmem:[#allocation5 + $0x4b4] sm:$0xf]
    %v461 = vld [vmem:[#allocation5 + $0x4b8] sm:$0xf]
    %v462 = vld [vmem:[#allocation5 + $0x4bc] sm:$0xf]
    %v463 = vld [vmem:[#allocation5 + $0x4c0] sm:$0xf]
    %v464 = vld [vmem:[#allocation5 + $0x4c4] sm:$0xf]
    %v465 = vld [vmem:[#allocation5 + $0x4c8] sm:$0xf]
    %v466 = vld [vmem:[#allocation5 + $0x4cc] sm:$0xf]
    %v467 = vld [vmem:[#allocation5 + $0x4d0] sm:$0xf]
    %v468 = vld [vmem:[#allocation5 + $0x4d4] sm:$0xf]
    %v469 = vld [vmem:[#allocation5 + $0x4d8] sm:$0xf]
    %v470 = vld [vmem:[#allocation5 + $0x4dc] sm:$0xf]
    %v471 = vld [vmem:[#allocation5 + $0x4e0] sm:$0xf]
    %v472 = vld [vmem:[#allocation5 + $0x4e4] sm:$0xf]
    %v473 = vld [vmem:[#allocation5 + $0x4e8] sm:$0xf]
    %v474 = vld [vmem:[#allocation5 + $0x4ec] sm:$0xf]
    %v475 = vld [vmem:[#allocation5 + $0x4f0] sm:$0xf]
    %v476 = vld [vmem:[#allocation5 + $0x4f4] sm:$0xf]
    %v477 = vld [vmem:[#allocation5 + $0x4f8] sm:$0xf]
    %v478 = vld [vmem:[#allocation5 + $0x4fc] sm:$0xf]
    %v479 = vld [vmem:[#allocation5 + $0x500] sm:$0xf]
    %v480 = vld [vmem:[#allocation5 + $0x504] sm:$0xf]
    %v481 = vld [vmem:[#allocation5 + $0x508] sm:$0xf]
    %v482 = vld [vmem:[#allocation5 + $0x50c] sm:$0xf]
    %v483 = vld [vmem:[#allocation5 + $0x510] sm:$0xf]
    %v484 = vld [vmem:[#allocation5 + $0x514] sm:$0xf]
    %v485 = vld [vmem:[#allocation5 + $0x518] sm:$0xf]
    %v486 = vld [vmem:[#allocation5 + $0x51c] sm:$0xf]
    %v487 = vld [vmem:[#allocation5 + $0x520] sm:$0xf]
    %v488 = vld [vmem:[#allocation5 + $0x524] sm:$0xf]
    %v489 = vld [vmem:[#allocation5 + $0x528] sm:$0xf]
    %v490 = vld [vmem:[#allocation5 + $0x52c] sm:$0xf]
    %v491 = vld [vmem:[#allocation5 + $0x530] sm:$0xf]
    %v492 = vld [vmem:[#allocation5 + $0x534] sm:$0xf]
    %v493 = vld [vmem:[#allocation5 + $0x538] sm:$0xf]
    %v494 = vld [vmem:[#allocation5 + $0x53c] sm:$0xf]
    %v495 = vld [vmem:[#allocation5 + $0x540] sm:$0xf]
    %v496 = vld [vmem:[#allocation5 + $0x544] sm:$0xf]
    %v497 = vld [vmem:[#allocation5 + $0x548] sm:$0xf]
    %v498 = vld [vmem:[#allocation5 + $0x54c] sm:$0xf]
    %v499 = vld [vmem:[#allocation5 + $0x550] sm:$0xf]
    %v500 = vld [vmem:[#allocation5 + $0x554] sm:$0xf]
    %v501 = vld [vmem:[#allocation5 + $0x558] sm:$0xf]
    %v502 = vld [vmem:[#allocation5 + $0x55c] sm:$0xf]
    %v503 = vld [vmem:[#allocation5 + $0x560] sm:$0xf]
    %v504 = vld [vmem:[#allocation5 + $0x564] sm:$0xf]
    %v505 = vld [vmem:[#allocation5 + $0x568] sm:$0xf]
    %v506 = vld [vmem:[#allocation5 + $0x56c] sm:$0xf]
    %v507 = vld [vmem:[#allocation5 + $0x570] sm:$0xf]
    %v508 = vld [vmem:[#allocation5 + $0x574] sm:$0xf]
    %v509 = vld [vmem:[#allocation5 + $0x578] sm:$0xf]
    %v510 = vld [vmem:[#allocation5 + $0x57c] sm:$0xf]
    %v511 = vld [vmem:[#allocation5 + $0x580] sm:$0xf]
    %v512 = vld [vmem:[#allocation5 + $0x584] sm:$0xf]
    %v513 = vld [vmem:[#allocation5 + $0x588] sm:$0xf]
    %v514 = vld [vmem:[#allocation5 + $0x58c] sm:$0xf]
    %v515 = vld [vmem:[#allocation5 + $0x590] sm:$0xf]
    %v516 = vld [vmem:[#allocation5 + $0x594] sm:$0xf]
    %v517 = vld [vmem:[#allocation5 + $0x598] sm:$0xf]
    %v518 = vld [vmem:[#allocation5 + $0x59c] sm:$0xf]
    %v519 = vld [vmem:[#allocation5 + $0x5a0] sm:$0xf]
    %v520 = vld [vmem:[#allocation5 + $0x5a4] sm:$0xf]
    %v521 = vld [vmem:[#allocation5 + $0x5a8] sm:$0xf]
    %v522 = vld [vmem:[#allocation5 + $0x5ac] sm:$0xf]
    %v523 = vld [vmem:[#allocation5 + $0x5b0] sm:$0xf]
    %v524 = vld [vmem:[#allocation5 + $0x5b4] sm:$0xf]
    %v525 = vld [vmem:[#allocation5 + $0x5b8] sm:$0xf]
    %v526 = vld [vmem:[#allocation5 + $0x5bc] sm:$0xf]
    %v527 = vld [vmem:[#allocation5 + $0x5c0] sm:$0xf]
    %v528 = vld [vmem:[#allocation5 + $0x5c4] sm:$0xf]
    %v529 = vld [vmem:[#allocation5 + $0x5c8] sm:$0xf]
    %v530 = vld [vmem:[#allocation5 + $0x5cc] sm:$0xf]
    %v531 = vld [vmem:[#allocation5 + $0x5d0] sm:$0xf]
    %v532 = vld [vmem:[#allocation5 + $0x5d4] sm:$0xf]
    %v533 = vld [vmem:[#allocation5 + $0x5d8] sm:$0xf]
    %v534 = vld [vmem:[#allocation5 + $0x5dc] sm:$0xf]
    %v535 = vld [vmem:[#allocation5 + $0x5e0] sm:$0xf]
    %v536 = vld [vmem:[#allocation5 + $0x5e4] sm:$0xf]
    %v537 = vld [vmem:[#allocation5 + $0x5e8] sm:$0xf]
    %v538 = vld [vmem:[#allocation5 + $0x5ec] sm:$0xf]
    %v539 = vld [vmem:[#allocation5 + $0x5f0] sm:$0xf]
    %v540 = vld [vmem:[#allocation5 + $0x5f4] sm:$0xf]
    %v541 = vld [vmem:[#allocation5 + $0x5f8] sm:$0xf]
    %v542 = vld [vmem:[#allocation5 + $0x5fc] sm:$0xf]
    %v543 = vld [vmem:[#allocation5 + $0x600] sm:$0xf]
    %v544 = vld [vmem:[#allocation5 + $0x604] sm:$0xf]
    %v545 = vld [vmem:[#allocation5 + $0x608] sm:$0xf]
    %v546 = vld [vmem:[#allocation5 + $0x60c] sm:$0xf]
    %v547 = vld [vmem:[#allocation5 + $0x610] sm:$0xf]
    %v548 = vld [vmem:[#allocation5 + $0x614] sm:$0xf]
    %v549 = vld [vmem:[#allocation5 + $0x618] sm:$0xf]
    %v550 = vld [vmem:[#allocation5 + $0x61c] sm:$0xf]
    %v551 = vld [vmem:[#allocation5 + $0x620] sm:$0xf]
    %v552 = vld [vmem:[#allocation5 + $0x624] sm:$0xf]
    %v553 = vld [vmem:[#allocation5 + $0x628] sm:$0xf]
    %v554 = vld [vmem:[#allocation5 + $0x62c] sm:$0xf]
    %v555 = vld [vmem:[#allocation5 + $0x630] sm:$0xf]
    %v556 = vld [vmem:[#allocation5 + $0x634] sm:$0xf]
    %v557 = vld [vmem:[#allocation5 + $0x638] sm:$0xf]
    %v558 = vld [vmem:[#allocation5 + $0x63c] sm:$0xf]
    %v559 = vld [vmem:[#allocation5 + $0x640] sm:$0xf]
    %v560 = vld [vmem:[#allocation5 + $0x644] sm:$0xf]
    %v561 = vld [vmem:[#allocation5 + $0x648] sm:$0xf]
    %v562 = vld [vmem:[#allocation5 + $0x64c] sm:$0xf]
    %v563 = vld [vmem:[#allocation5 + $0x650] sm:$0xf]
    %v564 = vld [vmem:[#allocation5 + $0x654] sm:$0xf]
    %v565 = vld [vmem:[#allocation5 + $0x658] sm:$0xf]
    %v566 = vld [vmem:[#allocation5 + $0x65c] sm:$0xf]
    %v567 = vld [vmem:[#allocation5 + $0x660] sm:$0xf]
    %v568 = vld [vmem:[#allocation5 + $0x664] sm:$0xf]
    %v569 = vld [vmem:[#allocation5 + $0x668] sm:$0xf]
    %v570 = vld [vmem:[#allocation5 + $0x66c] sm:$0xf]
    %v571 = vld [vmem:[#allocation5 + $0x670] sm:$0xf]
    %v572 = vld [vmem:[#allocation5 + $0x674] sm:$0xf]
    %v573 = vld [vmem:[#allocation5 + $0x678] sm:$0xf]
    %v574 = vld [vmem:[#allocation5 + $0x67c] sm:$0xf]
    %v575 = vld [vmem:[#allocation5 + $0x680] sm:$0xf]
    %v576 = vld [vmem:[#allocation5 + $0x684] sm:$0xf]
    %v577 = vld [vmem:[#allocation5 + $0x688] sm:$0xf]
    %v578 = vld [vmem:[#allocation5 + $0x68c] sm:$0xf]
    %v579 = vld [vmem:[#allocation5 + $0x690] sm:$0xf]
    %v580 = vld [vmem:[#allocation5 + $0x694] sm:$0xf]
    %v581 = vld [vmem:[#allocation5 + $0x698] sm:$0xf]
    %v582 = vld [vmem:[#allocation5 + $0x69c] sm:$0xf]
    %v583 = vld [vmem:[#allocation5 + $0x6a0] sm:$0xf]
    %v584 = vld [vmem:[#allocation5 + $0x6a4] sm:$0xf]
    %v585 = vld [vmem:[#allocation5 + $0x6a8] sm:$0xf]
    %v586 = vld [vmem:[#allocation5 + $0x6ac] sm:$0xf]
    %v587 = vld [vmem:[#allocation5 + $0x6b0] sm:$0xf]
    %v588 = vld [vmem:[#allocation5 + $0x6b4] sm:$0xf]
    %v589 = vld [vmem:[#allocation5 + $0x6b8] sm:$0xf]
    %v590 = vld [vmem:[#allocation5 + $0x6bc] sm:$0xf]
    %v591 = vld [vmem:[#allocation5 + $0x6c0] sm:$0xf]
    %v592 = vld [vmem:[#allocation5 + $0x6c4] sm:$0xf]
    %v593 = vld [vmem:[#allocation5 + $0x6c8] sm:$0xf]
    %v594 = vld [vmem:[#allocation5 + $0x6cc] sm:$0xf]
    %v595 = vld [vmem:[#allocation5 + $0x6d0] sm:$0xf]
    %v596 = vld [vmem:[#allocation5 + $0x6d4] sm:$0xf]
    %v597 = vld [vmem:[#allocation5 + $0x6d8] sm:$0xf]
    %v598 = vld [vmem:[#allocation5 + $0x6dc] sm:$0xf]
    %v599 = vld [vmem:[#allocation5 + $0x6e0] sm:$0xf]
    %v600 = vld [vmem:[#allocation5 + $0x6e4] sm:$0xf]
    %v601 = vld [vmem:[#allocation5 + $0x6e8] sm:$0xf]
    %v602 = vld [vmem:[#allocation5 + $0x6ec] sm:$0xf]
    %v603 = vld [vmem:[#allocation5 + $0x6f0] sm:$0xf]
    %v604 = vld [vmem:[#allocation5 + $0x6f4] sm:$0xf]
    %v605 = vld [vmem:[#allocation5 + $0x6f8] sm:$0xf]
    %v606 = vld [vmem:[#allocation5 + $0x6fc] sm:$0xf]
    %v607 = vld [vmem:[#allocation5 + $0x700] sm:$0xf]
    %v608 = vld [vmem:[#allocation5 + $0x704] sm:$0xf]
    %v1059 = vunpack.c.l.b16 %v159
    %v1060 = vunpack.c.l.b16 %v160
    %v1061 = vunpack.c.l.b16 %v161
    %v1062 = vunpack.c.l.b16 %v162
    %v1063 = vunpack.c.l.b16 %v163
    %v1064 = vunpack.c.l.b16 %v164
    %v1065 = vunpack.c.l.b16 %v165
    %v1066 = vunpack.c.l.b16 %v166
    %v1067 = vunpack.c.l.b16 %v167
    %v1068 = vunpack.c.l.b16 %v168
    %v1069 = vunpack.c.l.b16 %v169
    %v1070 = vunpack.c.l.b16 %v170
    %v1071 = vunpack.c.l.b16 %v171
    %v1072 = vunpack.c.l.b16 %v172
    %v1073 = vunpack.c.l.b16 %v173
    %v1074 = vunpack.c.l.b16 %v174
    %v1075 = vunpack.c.l.b16 %v175
    %v1076 = vunpack.c.l.b16 %v176
    %v1077 = vunpack.c.l.b16 %v177
    %v1078 = vunpack.c.l.b16 %v178
    %v1079 = vunpack.c.l.b16 %v179
    %v1080 = vunpack.c.l.b16 %v180
    %v1081 = vunpack.c.l.b16 %v181
    %v1082 = vunpack.c.l.b16 %v182
    %v1083 = vunpack.c.l.b16 %v183
    %v1084 = vunpack.c.l.b16 %v184
    %v1085 = vunpack.c.l.b16 %v185
    %v1086 = vunpack.c.l.b16 %v186
    %v1087 = vunpack.c.l.b16 %v187
    %v1088 = vunpack.c.l.b16 %v188
    %v1089 = vunpack.c.l.b16 %v189
    %v1090 = vunpack.c.l.b16 %v190
    %v1091 = vunpack.c.l.b16 %v191
    %v1092 = vunpack.c.l.b16 %v192
    %v1093 = vunpack.c.l.b16 %v193
    %v1094 = vunpack.c.l.b16 %v194
    %v1095 = vunpack.c.l.b16 %v195
    %v1096 = vunpack.c.l.b16 %v196
    %v1097 = vunpack.c.l.b16 %v197
    %v1098 = vunpack.c.l.b16 %v198
    %v1099 = vunpack.c.l.b16 %v199
    %v1100 = vunpack.c.l.b16 %v200
    %v1101 = vunpack.c.l.b16 %v201
    %v1102 = vunpack.c.l.b16 %v202
    %v1103 = vunpack.c.l.b16 %v203
    %v1104 = vunpack.c.l.b16 %v204
    %v1105 = vunpack.c.l.b16 %v205
    %v1106 = vunpack.c.l.b16 %v206
    %v1107 = vunpack.c.l.b16 %v207
    %v1108 = vunpack.c.l.b16 %v208
    %v1109 = vunpack.c.l.b16 %v209
    %v1110 = vunpack.c.l.b16 %v210
    %v1111 = vunpack.c.l.b16 %v211
    %v1112 = vunpack.c.l.b16 %v212
    %v1113 = vunpack.c.l.b16 %v213
    %v1114 = vunpack.c.l.b16 %v214
    %v1115 = vunpack.c.l.b16 %v215
    %v1116 = vunpack.c.l.b16 %v216
    %v1117 = vunpack.c.l.b16 %v217
    %v1118 = vunpack.c.l.b16 %v218
    %v1119 = vunpack.c.l.b16 %v219
    %v1120 = vunpack.c.l.b16 %v220
    %v1121 = vunpack.c.l.b16 %v221
    %v1122 = vunpack.c.l.b16 %v222
    %v1123 = vunpack.c.l.b16 %v223
    %v1124 = vunpack.c.l.b16 %v224
    %v1125 = vunpack.c.l.b16 %v225
    %v1126 = vunpack.c.l.b16 %v226
    %v1127 = vunpack.c.l.b16 %v227
    %v1128 = vunpack.c.l.b16 %v228
    %v1129 = vunpack.c.l.b16 %v229
    %v1130 = vunpack.c.l.b16 %v230
    %v1131 = vunpack.c.l.b16 %v231
    %v1132 = vunpack.c.l.b16 %v232
    %v1133 = vunpack.c.l.b16 %v233
    %v1134 = vunpack.c.l.b16 %v234
    %v1135 = vunpack.c.l.b16 %v235
    %v1136 = vunpack.c.l.b16 %v236
    %v1137 = vunpack.c.l.b16 %v237
    %v1138 = vunpack.c.l.b16 %v238
    %v1139 = vunpack.c.l.b16 %v239
    %v1140 = vunpack.c.l.b16 %v240
    %v1141 = vunpack.c.l.b16 %v241
    %v1142 = vunpack.c.l.b16 %v242
    %v1143 = vunpack.c.l.b16 %v243
    %v1144 = vunpack.c.l.b16 %v244
    %v1145 = vunpack.c.l.b16 %v245
    %v1146 = vunpack.c.l.b16 %v246
    %v1147 = vunpack.c.l.b16 %v247
    %v1148 = vunpack.c.l.b16 %v248
    %v1149 = vunpack.c.l.b16 %v249
    %v1150 = vunpack.c.l.b16 %v250
    %v1151 = vunpack.c.l.b16 %v251
    %v1152 = vunpack.c.l.b16 %v252
    %v1153 = vunpack.c.l.b16 %v253
    %v1154 = vunpack.c.l.b16 %v254
    %v1155 = vunpack.c.l.b16 %v255
    %v1156 = vunpack.c.l.b16 %v256
    %v1157 = vunpack.c.l.b16 %v257
    %v1158 = vunpack.c.l.b16 %v258
    %v1159 = vunpack.c.l.b16 %v259
    %v1160 = vunpack.c.l.b16 %v260
    %v1161 = vunpack.c.l.b16 %v261
    %v1162 = vunpack.c.l.b16 %v262
    %v1163 = vunpack.c.l.b16 %v263
    %v1164 = vunpack.c.l.b16 %v264
    %v1165 = vunpack.c.l.b16 %v265
    %v1166 = vunpack.c.l.b16 %v266
    %v1167 = vunpack.c.l.b16 %v267
    %v1168 = vunpack.c.l.b16 %v268
    %v1169 = vunpack.c.l.b16 %v269
    %v1170 = vunpack.c.l.b16 %v270
    %v1171 = vunpack.c.l.b16 %v271
    %v1172 = vunpack.c.l.b16 %v272
    %v1173 = vunpack.c.l.b16 %v273
    %v1174 = vunpack.c.l.b16 %v274
    %v1175 = vunpack.c.l.b16 %v275
    %v1176 = vunpack.c.l.b16 %v276
    %v1177 = vunpack.c.l.b16 %v277
    %v1178 = vunpack.c.l.b16 %v278
    %v1179 = vunpack.c.l.b16 %v279
    %v1180 = vunpack.c.l.b16 %v280
    %v1181 = vunpack.c.l.b16 %v281
    %v1182 = vunpack.c.l.b16 %v282
    %v1183 = vunpack.c.l.b16 %v283
    %v1184 = vunpack.c.l.b16 %v284
    %v1185 = vunpack.c.l.b16 %v285
    %v1186 = vunpack.c.l.b16 %v286
    %v1187 = vunpack.c.l.b16 %v287
    %v1188 = vunpack.c.l.b16 %v288
    %v1189 = vunpack.c.l.b16 %v289
    %v1190 = vunpack.c.l.b16 %v290
    %v1191 = vunpack.c.l.b16 %v291
    %v1192 = vunpack.c.l.b16 %v292
    %v1193 = vunpack.c.l.b16 %v293
    %v1194 = vunpack.c.l.b16 %v294
    %v1195 = vunpack.c.l.b16 %v295
    %v1196 = vunpack.c.l.b16 %v296
    %v1197 = vunpack.c.l.b16 %v297
    %v1198 = vunpack.c.l.b16 %v298
    %v1199 = vunpack.c.l.b16 %v299
    %v1200 = vunpack.c.l.b16 %v300
    %v1201 = vunpack.c.l.b16 %v301
    %v1202 = vunpack.c.l.b16 %v302
    %v1203 = vunpack.c.l.b16 %v303
    %v1204 = vunpack.c.l.b16 %v304
    %v1205 = vunpack.c.l.b16 %v305
    %v1206 = vunpack.c.l.b16 %v306
    %v1207 = vunpack.c.l.b16 %v307
    %v1208 = vunpack.c.l.b16 %v308
    %v1209 = vunpack.c.l.b16 %v309
    %v1210 = vunpack.c.l.b16 %v310
    %v1211 = vunpack.c.l.b16 %v311
    %v1212 = vunpack.c.l.b16 %v312
    %v1213 = vunpack.c.l.b16 %v313
    %v1214 = vunpack.c.l.b16 %v314
    %v1215 = vunpack.c.l.b16 %v315
    %v1216 = vunpack.c.l.b16 %v316
    %v1217 = vunpack.c.l.b16 %v317
    %v1218 = vunpack.c.l.b16 %v318
    %v1219 = vunpack.c.l.b16 %v319
    %v1220 = vunpack.c.l.b16 %v320
    %v1221 = vunpack.c.l.b16 %v321
    %v1222 = vunpack.c.l.b16 %v322
    %v1223 = vunpack.c.l.b16 %v323
    %v1224 = vunpack.c.l.b16 %v324
    %v1225 = vunpack.c.l.b16 %v325
    %v1226 = vunpack.c.l.b16 %v326
    %v1227 = vunpack.c.l.b16 %v327
    %v1228 = vunpack.c.l.b16 %v328
    %v1229 = vunpack.c.l.b16 %v329
    %v1230 = vunpack.c.l.b16 %v330
    %v1231 = vunpack.c.l.b16 %v331
    %v1232 = vunpack.c.l.b16 %v332
    %v1233 = vunpack.c.l.b16 %v333
    %v1234 = vunpack.c.l.b16 %v334
    %v1235 = vunpack.c.l.b16 %v335
    %v1236 = vunpack.c.l.b16 %v336
    %v1237 = vunpack.c.l.b16 %v337
    %v1238 = vunpack.c.l.b16 %v338
    %v1239 = vunpack.c.l.b16 %v339
    %v1240 = vunpack.c.l.b16 %v340
    %v1241 = vunpack.c.l.b16 %v341
    %v1242 = vunpack.c.l.b16 %v342
    %v1243 = vunpack.c.l.b16 %v343
    %v1244 = vunpack.c.l.b16 %v344
    %v1245 = vunpack.c.l.b16 %v345
    %v1246 = vunpack.c.l.b16 %v346
    %v1247 = vunpack.c.l.b16 %v347
    %v1248 = vunpack.c.l.b16 %v348
    %v1249 = vunpack.c.l.b16 %v349
    %v1250 = vunpack.c.l.b16 %v350
    %v1251 = vunpack.c.l.b16 %v351
    %v1252 = vunpack.c.l.b16 %v352
    %v1253 = vunpack.c.l.b16 %v353
    %v1254 = vunpack.c.l.b16 %v354
    %v1255 = vunpack.c.l.b16 %v355
    %v1256 = vunpack.c.l.b16 %v356
    %v1257 = vunpack.c.l.b16 %v357
    %v1258 = vunpack.c.l.b16 %v358
    %v1259 = vunpack.c.l.b16 %v359
    %v1260 = vunpack.c.l.b16 %v360
    %v1261 = vunpack.c.l.b16 %v361
    %v1262 = vunpack.c.l.b16 %v362
    %v1263 = vunpack.c.l.b16 %v363
    %v1264 = vunpack.c.l.b16 %v364
    %v1265 = vunpack.c.l.b16 %v365
    %v1266 = vunpack.c.l.b16 %v366
    %v1267 = vunpack.c.l.b16 %v367
    %v1268 = vunpack.c.l.b16 %v368
    %v1269 = vunpack.c.l.b16 %v369
    %v1270 = vunpack.c.l.b16 %v370
    %v1271 = vunpack.c.l.b16 %v371
    %v1272 = vunpack.c.l.b16 %v372
    %v1273 = vunpack.c.l.b16 %v373
    %v1274 = vunpack.c.l.b16 %v374
    %v1275 = vunpack.c.l.b16 %v375
    %v1276 = vunpack.c.l.b16 %v376
    %v1277 = vunpack.c.l.b16 %v377
    %v1278 = vunpack.c.l.b16 %v378
    %v1279 = vunpack.c.l.b16 %v379
    %v1280 = vunpack.c.l.b16 %v380
    %v1281 = vunpack.c.l.b16 %v381
    %v1282 = vunpack.c.l.b16 %v382
    %v1283 = vunpack.c.l.b16 %v383
    %v1284 = vunpack.c.l.b16 %v384
    %v1285 = vunpack.c.l.b16 %v385
    %v1286 = vunpack.c.l.b16 %v386
    %v1287 = vunpack.c.l.b16 %v387
    %v1288 = vunpack.c.l.b16 %v388
    %v1289 = vunpack.c.l.b16 %v389
    %v1290 = vunpack.c.l.b16 %v390
    %v1291 = vunpack.c.l.b16 %v391
    %v1292 = vunpack.c.l.b16 %v392
    %v1293 = vunpack.c.l.b16 %v393
    %v1294 = vunpack.c.l.b16 %v394
    %v1295 = vunpack.c.l.b16 %v395
    %v1296 = vunpack.c.l.b16 %v396
    %v1297 = vunpack.c.l.b16 %v397
    %v1298 = vunpack.c.l.b16 %v398
    %v1299 = vunpack.c.l.b16 %v399
    %v1300 = vunpack.c.l.b16 %v400
    %v1301 = vunpack.c.l.b16 %v401
    %v1302 = vunpack.c.l.b16 %v402
    %v1303 = vunpack.c.l.b16 %v403
    %v1304 = vunpack.c.l.b16 %v404
    %v1305 = vunpack.c.l.b16 %v405
    %v1306 = vunpack.c.l.b16 %v406
    %v1307 = vunpack.c.l.b16 %v407
    %v1308 = vunpack.c.l.b16 %v408
    %v1309 = vunpack.c.l.b16 %v409
    %v1310 = vunpack.c.l.b16 %v410
    %v1311 = vunpack.c.l.b16 %v411
    %v1312 = vunpack.c.l.b16 %v412
    %v1313 = vunpack.c.l.b16 %v413
    %v1314 = vunpack.c.l.b16 %v414
    %v1315 = vunpack.c.l.b16 %v415
    %v1316 = vunpack.c.l.b16 %v416
    %v1317 = vunpack.c.l.b16 %v417
    %v1318 = vunpack.c.l.b16 %v418
    %v1319 = vunpack.c.l.b16 %v419
    %v1320 = vunpack.c.l.b16 %v420
    %v1321 = vunpack.c.l.b16 %v421
    %v1322 = vunpack.c.l.b16 %v422
    %v1323 = vunpack.c.l.b16 %v423
    %v1324 = vunpack.c.l.b16 %v424
    %v1325 = vunpack.c.l.b16 %v425
    %v1326 = vunpack.c.l.b16 %v426
    %v1327 = vunpack.c.l.b16 %v427
    %v1328 = vunpack.c.l.b16 %v428
    %v1329 = vunpack.c.l.b16 %v429
    %v1330 = vunpack.c.l.b16 %v430
    %v1331 = vunpack.c.l.b16 %v431
    %v1332 = vunpack.c.l.b16 %v432
    %v1333 = vunpack.c.l.b16 %v433
    %v1334 = vunpack.c.l.b16 %v434
    %v1335 = vunpack.c.l.b16 %v435
    %v1336 = vunpack.c.l.b16 %v436
    %v1337 = vunpack.c.l.b16 %v437
    %v1338 = vunpack.c.l.b16 %v438
    %v1339 = vunpack.c.l.b16 %v439
    %v1340 = vunpack.c.l.b16 %v440
    %v1341 = vunpack.c.l.b16 %v441
    %v1342 = vunpack.c.l.b16 %v442
    %v1343 = vunpack.c.l.b16 %v443
    %v1344 = vunpack.c.l.b16 %v444
    %v1345 = vunpack.c.l.b16 %v445
    %v1346 = vunpack.c.l.b16 %v446
    %v1347 = vunpack.c.l.b16 %v447
    %v1348 = vunpack.c.l.b16 %v448
    %v1349 = vunpack.c.l.b16 %v449
    %v1350 = vunpack.c.l.b16 %v450
    %v1351 = vunpack.c.l.b16 %v451
    %v1352 = vunpack.c.l.b16 %v452
    %v1353 = vunpack.c.l.b16 %v453
    %v1354 = vunpack.c.l.b16 %v454
    %v1355 = vunpack.c.l.b16 %v455
    %v1356 = vunpack.c.l.b16 %v456
    %v1357 = vunpack.c.l.b16 %v457
    %v1358 = vunpack.c.l.b16 %v458
    %v1359 = vunpack.c.l.b16 %v459
    %v1360 = vunpack.c.l.b16 %v460
    %v1361 = vunpack.c.l.b16 %v461
    %v1362 = vunpack.c.l.b16 %v462
    %v1363 = vunpack.c.l.b16 %v463
    %v1364 = vunpack.c.l.b16 %v464
    %v1365 = vunpack.c.l.b16 %v465
    %v1366 = vunpack.c.l.b16 %v466
    %v1367 = vunpack.c.l.b16 %v467
    %v1368 = vunpack.c.l.b16 %v468
    %v1369 = vunpack.c.l.b16 %v469
    %v1370 = vunpack.c.l.b16 %v470
    %v1371 = vunpack.c.l.b16 %v471
    %v1372 = vunpack.c.l.b16 %v472
    %v1373 = vunpack.c.l.b16 %v473
    %v1374 = vunpack.c.l.b16 %v474
    %v1375 = vunpack.c.l.b16 %v475
    %v1376 = vunpack.c.l.b16 %v476
    %v1377 = vunpack.c.l.b16 %v477
    %v1378 = vunpack.c.l.b16 %v478
    %v1379 = vunpack.c.l.b16 %v479
    %v1380 = vunpack.c.l.b16 %v480
    %v1381 = vunpack.c.l.b16 %v481
    %v1382 = vunpack.c.l.b16 %v482
    %v1383 = vunpack.c.l.b16 %v483
    %v1384 = vunpack.c.l.b16 %v484
    %v1385 = vunpack.c.l.b16 %v485
    %v1386 = vunpack.c.l.b16 %v486
    %v1387 = vunpack.c.l.b16 %v487
    %v1388 = vunpack.c.l.b16 %v488
    %v1389 = vunpack.c.l.b16 %v489
    %v1390 = vunpack.c.l.b16 %v490
    %v1391 = vunpack.c.l.b16 %v491
    %v1392 = vunpack.c.l.b16 %v492
    %v1393 = vunpack.c.l.b16 %v493
    %v1394 = vunpack.c.l.b16 %v494
    %v1395 = vunpack.c.l.b16 %v495
    %v1396 = vunpack.c.l.b16 %v496
    %v1397 = vunpack.c.l.b16 %v497
    %v1398 = vunpack.c.l.b16 %v498
    %v1399 = vunpack.c.l.b16 %v499
    %v1400 = vunpack.c.l.b16 %v500
    %v1401 = vunpack.c.l.b16 %v501
    %v1402 = vunpack.c.l.b16 %v502
    %v1403 = vunpack.c.l.b16 %v503
    %v1404 = vunpack.c.l.b16 %v504
    %v1405 = vunpack.c.l.b16 %v505
    %v1406 = vunpack.c.l.b16 %v506
    %v1407 = vunpack.c.l.b16 %v507
    %v1408 = vunpack.c.l.b16 %v508
    %v1409 = vunpack.c.l.b16 %v509
    %v1410 = vunpack.c.l.b16 %v510
    %v1411 = vunpack.c.l.b16 %v511
    %v1412 = vunpack.c.l.b16 %v512
    %v1413 = vunpack.c.l.b16 %v513
    %v1414 = vunpack.c.l.b16 %v514
    %v1415 = vunpack.c.l.b16 %v515
    %v1416 = vunpack.c.l.b16 %v516
    %v1417 = vunpack.c.l.b16 %v517
    %v1418 = vunpack.c.l.b16 %v518
    %v1419 = vunpack.c.l.b16 %v519
    %v1420 = vunpack.c.l.b16 %v520
    %v1421 = vunpack.c.l.b16 %v521
    %v1422 = vunpack.c.l.b16 %v522
    %v1423 = vunpack.c.l.b16 %v523
    %v1424 = vunpack.c.l.b16 %v524
    %v1425 = vunpack.c.l.b16 %v525
    %v1426 = vunpack.c.l.b16 %v526
    %v1427 = vunpack.c.l.b16 %v527
    %v1428 = vunpack.c.l.b16 %v528
    %v1429 = vunpack.c.l.b16 %v529
    %v1430 = vunpack.c.l.b16 %v530
    %v1431 = vunpack.c.l.b16 %v531
    %v1432 = vunpack.c.l.b16 %v532
    %v1433 = vunpack.c.l.b16 %v533
    %v1434 = vunpack.c.l.b16 %v534
    %v1435 = vunpack.c.l.b16 %v535
    %v1436 = vunpack.c.l.b16 %v536
    %v1437 = vunpack.c.l.b16 %v537
    %v1438 = vunpack.c.l.b16 %v538
    %v1439 = vunpack.c.l.b16 %v539
    %v1440 = vunpack.c.l.b16 %v540
    %v1441 = vunpack.c.l.b16 %v541
    %v1442 = vunpack.c.l.b16 %v542
    %v1443 = vunpack.c.l.b16 %v543
    %v1444 = vunpack.c.l.b16 %v544
    %v1445 = vunpack.c.l.b16 %v545
    %v1446 = vunpack.c.l.b16 %v546
    %v1447 = vunpack.c.l.b16 %v547
    %v1448 = vunpack.c.l.b16 %v548
    %v1449 = vunpack.c.l.b16 %v549
    %v1450 = vunpack.c.l.b16 %v550
    %v1451 = vunpack.c.l.b16 %v551
    %v1452 = vunpack.c.l.b16 %v552
    %v1453 = vunpack.c.l.b16 %v553
    %v1454 = vunpack.c.l.b16 %v554
    %v1455 = vunpack.c.l.b16 %v555
    %v1456 = vunpack.c.l.b16 %v556
    %v1457 = vunpack.c.l.b16 %v557
    %v1458 = vunpack.c.l.b16 %v558
    %v1459 = vunpack.c.l.b16 %v559
    %v1460 = vunpack.c.l.b16 %v560
    %v1461 = vunpack.c.l.b16 %v561
    %v1462 = vunpack.c.l.b16 %v562
    %v1463 = vunpack.c.l.b16 %v563
    %v1464 = vunpack.c.l.b16 %v564
    %v1465 = vunpack.c.l.b16 %v565
    %v1466 = vunpack.c.l.b16 %v566
    %v1467 = vunpack.c.l.b16 %v567
    %v1468 = vunpack.c.l.b16 %v568
    %v1469 = vunpack.c.l.b16 %v569
    %v1470 = vunpack.c.l.b16 %v570
    %v1471 = vunpack.c.l.b16 %v571
    %v1472 = vunpack.c.l.b16 %v572
    %v1473 = vunpack.c.l.b16 %v573
    %v1474 = vunpack.c.l.b16 %v574
    %v1475 = vunpack.c.l.b16 %v575
    %v1476 = vunpack.c.l.b16 %v576
    %v1477 = vunpack.c.l.b16 %v577
    %v1478 = vunpack.c.l.b16 %v578
    %v1479 = vunpack.c.l.b16 %v579
    %v1480 = vunpack.c.l.b16 %v580
    %v1481 = vunpack.c.l.b16 %v581
    %v1482 = vunpack.c.l.b16 %v582
    %v1483 = vunpack.c.l.b16 %v583
    %v1484 = vunpack.c.l.b16 %v584
    %v1485 = vunpack.c.l.b16 %v585
    %v1486 = vunpack.c.l.b16 %v586
    %v1487 = vunpack.c.l.b16 %v587
    %v1488 = vunpack.c.l.b16 %v588
    %v1489 = vunpack.c.l.b16 %v589
    %v1490 = vunpack.c.l.b16 %v590
    %v1491 = vunpack.c.l.b16 %v591
    %v1492 = vunpack.c.l.b16 %v592
    %v1493 = vunpack.c.l.b16 %v593
    %v1494 = vunpack.c.l.b16 %v594
    %v1495 = vunpack.c.l.b16 %v595
    %v1496 = vunpack.c.l.b16 %v596
    %v1497 = vunpack.c.l.b16 %v597
    %v1498 = vunpack.c.l.b16 %v598
    %v1499 = vunpack.c.l.b16 %v599
    %v1500 = vunpack.c.l.b16 %v600
    %v1501 = vunpack.c.l.b16 %v601
    %v1502 = vunpack.c.l.b16 %v602
    %v1503 = vunpack.c.l.b16 %v603
    %v1504 = vunpack.c.l.b16 %v604
    %v1505 = vunpack.c.l.b16 %v605
    %v1506 = vunpack.c.l.b16 %v606
    %v1507 = vunpack.c.l.b16 %v607
    %v1508 = vunpack.c.l.b16 %v608
    %v1509 = vpack.c.b16 %v1060, %v1059
    %v1510 = vpack.c.b16 %v1062, %v1061
    %v1511 = vpack.c.b16 %v1064, %v1063
    %v1512 = vpack.c.b16 %v1066, %v1065
    %v1513 = vpack.c.b16 %v1068, %v1067
    %v1514 = vpack.c.b16 %v1070, %v1069
    %v1515 = vpack.c.b16 %v1072, %v1071
    %v1516 = vpack.c.b16 %v1074, %v1073
    %v1517 = vpack.c.b16 %v1076, %v1075
    %v1518 = vpack.c.b16 %v1078, %v1077
    %v1519 = vpack.c.b16 %v1080, %v1079
    %v1520 = vpack.c.b16 %v1082, %v1081
    %v1521 = vpack.c.b16 %v1084, %v1083
    %v1522 = vpack.c.b16 %v1086, %v1085
    %v1523 = vpack.c.b16 %v1088, %v1087
    %v1524 = vpack.c.b16 %v1090, %v1089
    %v1525 = vpack.c.b16 %v1092, %v1091
    %v1526 = vpack.c.b16 %v1094, %v1093
    %v1527 = vpack.c.b16 %v1096, %v1095
    %v1528 = vpack.c.b16 %v1098, %v1097
    %v1529 = vpack.c.b16 %v1100, %v1099
    %v1530 = vpack.c.b16 %v1102, %v1101
    %v1531 = vpack.c.b16 %v1104, %v1103
    %v1532 = vpack.c.b16 %v1106, %v1105
    %v1533 = vpack.c.b16 %v1108, %v1107
    %v1534 = vpack.c.b16 %v1110, %v1109
    %v1535 = vpack.c.b16 %v1112, %v1111
    %v1536 = vpack.c.b16 %v1114, %v1113
    %v1537 = vpack.c.b16 %v1116, %v1115
    %v1538 = vpack.c.b16 %v1118, %v1117
    %v1539 = vpack.c.b16 %v1120, %v1119
    %v1540 = vpack.c.b16 %v1122, %v1121
    %v1541 = vpack.c.b16 %v1124, %v1123
    %v1542 = vpack.c.b16 %v1126, %v1125
    %v1543 = vpack.c.b16 %v1128, %v1127
    %v1544 = vpack.c.b16 %v1130, %v1129
    %v1545 = vpack.c.b16 %v1132, %v1131
    %v1546 = vpack.c.b16 %v1134, %v1133
    %v1547 = vpack.c.b16 %v1136, %v1135
    %v1548 = vpack.c.b16 %v1138, %v1137
    %v1549 = vpack.c.b16 %v1140, %v1139
    %v1550 = vpack.c.b16 %v1142, %v1141
    %v1551 = vpack.c.b16 %v1144, %v1143
    %v1552 = vpack.c.b16 %v1146, %v1145
    %v1553 = vpack.c.b16 %v1148, %v1147
    %v1554 = vpack.c.b16 %v1150, %v1149
    %v1555 = vpack.c.b16 %v1152, %v1151
    %v1556 = vpack.c.b16 %v1154, %v1153
    %v1557 = vpack.c.b16 %v1156, %v1155
    %v1558 = vpack.c.b16 %v1158, %v1157
    %v1559 = vpack.c.b16 %v1160, %v1159
    %v1560 = vpack.c.b16 %v1162, %v1161
    %v1561 = vpack.c.b16 %v1164, %v1163
    %v1562 = vpack.c.b16 %v1166, %v1165
    %v1563 = vpack.c.b16 %v1168, %v1167
    %v1564 = vpack.c.b16 %v1170, %v1169
    %v1565 = vpack.c.b16 %v1172, %v1171
    %v1566 = vpack.c.b16 %v1174, %v1173
    %v1567 = vpack.c.b16 %v1176, %v1175
    %v1568 = vpack.c.b16 %v1178, %v1177
    %v1569 = vpack.c.b16 %v1180, %v1179
    %v1570 = vpack.c.b16 %v1182, %v1181
    %v1571 = vpack.c.b16 %v1184, %v1183
    %v1572 = vpack.c.b16 %v1186, %v1185
    %v1573 = vpack.c.b16 %v1188, %v1187
    %v1574 = vpack.c.b16 %v1190, %v1189
    %v1575 = vpack.c.b16 %v1192, %v1191
    %v1576 = vpack.c.b16 %v1194, %v1193
    %v1577 = vpack.c.b16 %v1196, %v1195
    %v1578 = vpack.c.b16 %v1198, %v1197
    %v1579 = vpack.c.b16 %v1200, %v1199
    %v1580 = vpack.c.b16 %v1202, %v1201
    %v1581 = vpack.c.b16 %v1204, %v1203
    %v1582 = vpack.c.b16 %v1206, %v1205
    %v1583 = vpack.c.b16 %v1208, %v1207
    %v1584 = vpack.c.b16 %v1210, %v1209
    %v1585 = vpack.c.b16 %v1212, %v1211
    %v1586 = vpack.c.b16 %v1214, %v1213
    %v1587 = vpack.c.b16 %v1216, %v1215
    %v1588 = vpack.c.b16 %v1218, %v1217
    %v1589 = vpack.c.b16 %v1220, %v1219
    %v1590 = vpack.c.b16 %v1222, %v1221
    %v1591 = vpack.c.b16 %v1224, %v1223
    %v1592 = vpack.c.b16 %v1226, %v1225
    %v1593 = vpack.c.b16 %v1228, %v1227
    %v1594 = vpack.c.b16 %v1230, %v1229
    %v1595 = vpack.c.b16 %v1232, %v1231
    %v1596 = vpack.c.b16 %v1234, %v1233
    %v1597 = vpack.c.b16 %v1236, %v1235
    %v1598 = vpack.c.b16 %v1238, %v1237
    %v1599 = vpack.c.b16 %v1240, %v1239
    %v1600 = vpack.c.b16 %v1242, %v1241
    %v1601 = vpack.c.b16 %v1244, %v1243
    %v1602 = vpack.c.b16 %v1246, %v1245
    %v1603 = vpack.c.b16 %v1248, %v1247
    %v1604 = vpack.c.b16 %v1250, %v1249
    %v1605 = vpack.c.b16 %v1252, %v1251
    %v1606 = vpack.c.b16 %v1254, %v1253
    %v1607 = vpack.c.b16 %v1256, %v1255
    %v1608 = vpack.c.b16 %v1258, %v1257
    %v1609 = vpack.c.b16 %v1260, %v1259
    %v1610 = vpack.c.b16 %v1262, %v1261
    %v1611 = vpack.c.b16 %v1264, %v1263
    %v1612 = vpack.c.b16 %v1266, %v1265
    %v1613 = vpack.c.b16 %v1268, %v1267
    %v1614 = vpack.c.b16 %v1270, %v1269
    %v1615 = vpack.c.b16 %v1272, %v1271
    %v1616 = vpack.c.b16 %v1274, %v1273
    %v1617 = vpack.c.b16 %v1276, %v1275
    %v1618 = vpack.c.b16 %v1278, %v1277
    %v1619 = vpack.c.b16 %v1280, %v1279
    %v1620 = vpack.c.b16 %v1282, %v1281
    %v1621 = vpack.c.b16 %v1284, %v1283
    %v1622 = vpack.c.b16 %v1286, %v1285
    %v1623 = vpack.c.b16 %v1288, %v1287
    %v1624 = vpack.c.b16 %v1290, %v1289
    %v1625 = vpack.c.b16 %v1292, %v1291
    %v1626 = vpack.c.b16 %v1294, %v1293
    %v1627 = vpack.c.b16 %v1296, %v1295
    %v1628 = vpack.c.b16 %v1298, %v1297
    %v1629 = vpack.c.b16 %v1300, %v1299
    %v1630 = vpack.c.b16 %v1302, %v1301
    %v1631 = vpack.c.b16 %v1304, %v1303
    %v1632 = vpack.c.b16 %v1306, %v1305
    %v1633 = vpack.c.b16 %v1308, %v1307
    %v1634 = vpack.c.b16 %v1310, %v1309
    %v1635 = vpack.c.b16 %v1312, %v1311
    %v1636 = vpack.c.b16 %v1314, %v1313
    %v1637 = vpack.c.b16 %v1316, %v1315
    %v1638 = vpack.c.b16 %v1318, %v1317
    %v1639 = vpack.c.b16 %v1320, %v1319
    %v1640 = vpack.c.b16 %v1322, %v1321
    %v1641 = vpack.c.b16 %v1324, %v1323
    %v1642 = vpack.c.b16 %v1326, %v1325
    %v1643 = vpack.c.b16 %v1328, %v1327
    %v1644 = vpack.c.b16 %v1330, %v1329
    %v1645 = vpack.c.b16 %v1332, %v1331
    %v1646 = vpack.c.b16 %v1334, %v1333
    %v1647 = vpack.c.b16 %v1336, %v1335
    %v1648 = vpack.c.b16 %v1338, %v1337
    %v1649 = vpack.c.b16 %v1340, %v1339
    %v1650 = vpack.c.b16 %v1342, %v1341
    %v1651 = vpack.c.b16 %v1344, %v1343
    %v1652 = vpack.c.b16 %v1346, %v1345
    %v1653 = vpack.c.b16 %v1348, %v1347
    %v1654 = vpack.c.b16 %v1350, %v1349
    %v1655 = vpack.c.b16 %v1352, %v1351
    %v1656 = vpack.c.b16 %v1354, %v1353
    %v1657 = vpack.c.b16 %v1356, %v1355
    %v1658 = vpack.c.b16 %v1358, %v1357
    %v1659 = vpack.c.b16 %v1360, %v1359
    %v1660 = vpack.c.b16 %v1362, %v1361
    %v1661 = vpack.c.b16 %v1364, %v1363
    %v1662 = vpack.c.b16 %v1366, %v1365
    %v1663 = vpack.c.b16 %v1368, %v1367
    %v1664 = vpack.c.b16 %v1370, %v1369
    %v1665 = vpack.c.b16 %v1372, %v1371
    %v1666 = vpack.c.b16 %v1374, %v1373
    %v1667 = vpack.c.b16 %v1376, %v1375
    %v1668 = vpack.c.b16 %v1378, %v1377
    %v1669 = vpack.c.b16 %v1380, %v1379
    %v1670 = vpack.c.b16 %v1382, %v1381
    %v1671 = vpack.c.b16 %v1384, %v1383
    %v1672 = vpack.c.b16 %v1386, %v1385
    %v1673 = vpack.c.b16 %v1388, %v1387
    %v1674 = vpack.c.b16 %v1390, %v1389
    %v1675 = vpack.c.b16 %v1392, %v1391
    %v1676 = vpack.c.b16 %v1394, %v1393
    %v1677 = vpack.c.b16 %v1396, %v1395
    %v1678 = vpack.c.b16 %v1398, %v1397
    %v1679 = vpack.c.b16 %v1400, %v1399
    %v1680 = vpack.c.b16 %v1402, %v1401
    %v1681 = vpack.c.b16 %v1404, %v1403
    %v1682 = vpack.c.b16 %v1406, %v1405
    %v1683 = vpack.c.b16 %v1408, %v1407
    %v1684 = vpack.c.b16 %v1410, %v1409
    %v1685 = vpack.c.b16 %v1412, %v1411
    %v1686 = vpack.c.b16 %v1414, %v1413
    %v1687 = vpack.c.b16 %v1416, %v1415
    %v1688 = vpack.c.b16 %v1418, %v1417
    %v1689 = vpack.c.b16 %v1420, %v1419
    %v1690 = vpack.c.b16 %v1422, %v1421
    %v1691 = vpack.c.b16 %v1424, %v1423
    %v1692 = vpack.c.b16 %v1426, %v1425
    %v1693 = vpack.c.b16 %v1428, %v1427
    %v1694 = vpack.c.b16 %v1430, %v1429
    %v1695 = vpack.c.b16 %v1432, %v1431
    %v1696 = vpack.c.b16 %v1434, %v1433
    %v1697 = vpack.c.b16 %v1436, %v1435
    %v1698 = vpack.c.b16 %v1438, %v1437
    %v1699 = vpack.c.b16 %v1440, %v1439
    %v1700 = vpack.c.b16 %v1442, %v1441
    %v1701 = vpack.c.b16 %v1444, %v1443
    %v1702 = vpack.c.b16 %v1446, %v1445
    %v1703 = vpack.c.b16 %v1448, %v1447
    %v1704 = vpack.c.b16 %v1450, %v1449
    %v1705 = vpack.c.b16 %v1452, %v1451
    %v1706 = vpack.c.b16 %v1454, %v1453
    %v1707 = vpack.c.b16 %v1456, %v1455
    %v1708 = vpack.c.b16 %v1458, %v1457
    %v1709 = vpack.c.b16 %v1460, %v1459
    %v1710 = vpack.c.b16 %v1462, %v1461
    %v1711 = vpack.c.b16 %v1464, %v1463
    %v1712 = vpack.c.b16 %v1466, %v1465
    %v1713 = vpack.c.b16 %v1468, %v1467
    %v1714 = vpack.c.b16 %v1470, %v1469
    %v1715 = vpack.c.b16 %v1472, %v1471
    %v1716 = vpack.c.b16 %v1474, %v1473
    %v1717 = vpack.c.b16 %v1476, %v1475
    %v1718 = vpack.c.b16 %v1478, %v1477
    %v1719 = vpack.c.b16 %v1480, %v1479
    %v1720 = vpack.c.b16 %v1482, %v1481
    %v1721 = vpack.c.b16 %v1484, %v1483
    %v1722 = vpack.c.b16 %v1486, %v1485
    %v1723 = vpack.c.b16 %v1488, %v1487
    %v1724 = vpack.c.b16 %v1490, %v1489
    %v1725 = vpack.c.b16 %v1492, %v1491
    %v1726 = vpack.c.b16 %v1494, %v1493
    %v1727 = vpack.c.b16 %v1496, %v1495
    %v1728 = vpack.c.b16 %v1498, %v1497
    %v1729 = vpack.c.b16 %v1500, %v1499
    %v1730 = vpack.c.b16 %v1502, %v1501
    %v1731 = vpack.c.b16 %v1504, %v1503
    %v1732 = vpack.c.b16 %v1506, %v1505
    %v1733 = vpack.c.b16 %v1508, %v1507
    %vm1959 = vcmask 130048
    %v1961 = vsel %vm1959, %v158, 0
    %1963 = vmatprep.subr.bf16.mxu0 0
    %1964 = vmatpush1.bf16.msra.mxu0 %v1509
    %1965 = vmatprep.subr.bf16.mxu0 0
    %1966 = vmatpush1.bf16.msra.mxu0 %v1510
    %1967 = vmatprep.subr.bf16.mxu0 0
    %1968 = vmatpush1.bf16.msra.mxu0 %v1511
    %1969 = vmatprep.subr.bf16.mxu0 0
    %1970 = vmatpush1.bf16.msra.mxu0 %v1512
    %1971 = vmatprep.subr.bf16.mxu0 0
    %1972 = vmatpush1.bf16.msra.mxu0 %v1513
    %1973 = vmatprep.subr.bf16.mxu0 0
    %1974 = vmatpush1.bf16.msra.mxu0 %v1514
    %1975 = vmatprep.subr.bf16.mxu0 0
    %1976 = vmatpush1.bf16.msra.mxu0 %v1515
    %1977 = vmatprep.subr.bf16.mxu0 0
    %1978 = vmatpush1.bf16.msra.mxu0 %v1516
    %1979 = vmatprep.subr.bf16.mxu0 0
    %1980 = vmatpush1.bf16.msra.mxu0 %v1517
    %1981 = vmatprep.subr.bf16.mxu0 0
    %1982 = vmatpush1.bf16.msra.mxu0 %v1518
    %1983 = vmatprep.subr.bf16.mxu0 0
    %1984 = vmatpush1.bf16.msra.mxu0 %v1519
    %1985 = vmatprep.subr.bf16.mxu0 0
    %1986 = vmatpush1.bf16.msra.mxu0 %v1520
    %1987 = vmatprep.subr.bf16.mxu0 0
    %1988 = vmatpush1.bf16.msra.mxu0 %v1521
    %1989 = vmatprep.subr.bf16.mxu0 0
    %1990 = vmatpush1.bf16.msra.mxu0 %v1522
    %1991 = vmatprep.subr.bf16.mxu0 0
    %1992 = vmatpush1.bf16.msra.mxu0 %v1523
    %1993 = vmatprep.subr.bf16.mxu0 0
    %1994 = vmatpush1.bf16.msra.mxu0 %v1524
    %1995 = vmatprep.mubr.bf16.mxu0 %v131
    %1996 = vmatmul.mubr.bf16.gmra.mrb[0].mxu0 %v130
    %v1997 = vpop.f32.mrb[0].mxu0
    %v1998 = vadd.f32 0.0, %v1997
    %v1999 = vpop.f32.mrb[0].mxu0
    %v2000 = vpop.f32.mrb[0].mxu0
    %v2001 = vpop.f32.mrb[0].mxu0
    %2002 = vdwg.mxu0
    %2003 = vmatprep.subr.bf16.mxu0 0
    %2004 = vmatpush1.bf16.msra.mxu0 %v1525
    %2005 = vmatprep.subr.bf16.mxu0 0
    %2006 = vmatpush1.bf16.msra.mxu0 %v1526
    %2007 = vmatprep.subr.bf16.mxu0 0
    %2008 = vmatpush1.bf16.msra.mxu0 %v1527
    %2009 = vmatprep.subr.bf16.mxu0 0
    %2010 = vmatpush1.bf16.msra.mxu0 %v1528
    %2011 = vmatprep.subr.bf16.mxu0 0
    %2012 = vmatpush1.bf16.msra.mxu0 %v1529
    %2013 = vmatprep.subr.bf16.mxu0 0
    %2014 = vmatpush1.bf16.msra.mxu0 %v1530
    %2015 = vmatprep.subr.bf16.mxu0 0
    %2016 = vmatpush1.bf16.msra.mxu0 %v1531
    %2017 = vmatprep.subr.bf16.mxu0 0
    %2018 = vmatpush1.bf16.msra.mxu0 %v1532
    %2019 = vmatprep.subr.bf16.mxu0 0
    %2020 = vmatpush1.bf16.msra.mxu0 %v1533
    %2021 = vmatprep.subr.bf16.mxu0 0
    %2022 = vmatpush1.bf16.msra.mxu0 %v1534
    %2023 = vmatprep.subr.bf16.mxu0 0
    %2024 = vmatpush1.bf16.msra.mxu0 %v1535
    %2025 = vmatprep.subr.bf16.mxu0 0
    %2026 = vmatpush1.bf16.msra.mxu0 %v1536
    %2027 = vmatprep.subr.bf16.mxu0 0
    %2028 = vmatpush1.bf16.msra.mxu0 %v1537
    %2029 = vmatprep.subr.bf16.mxu0 0
    %2030 = vmatpush1.bf16.msra.mxu0 %v1538
    %2031 = vmatprep.subr.bf16.mxu0 0
    %2032 = vmatpush1.bf16.msra.mxu0 %v1539
    %2033 = vmatprep.subr.bf16.mxu0 0
    %2034 = vmatpush1.bf16.msra.mxu0 %v1540
    %2035 = vmatprep.mubr.bf16.mxu0 %v133
    %2036 = vmatmul.mubr.bf16.gmra.mrb[0].mxu0 %v132
    %v2037 = vpop.f32.mrb[0].mxu0
    %v2038 = vadd.f32 %v1998, %v2037
    %v2039 = vpop.f32.mrb[0].mxu0
    %v2040 = vpop.f32.mrb[0].mxu0
    %v2041 = vpop.f32.mrb[0].mxu0
    %2042 = vdwg.mxu0
    %2043 = vmatprep.subr.bf16.mxu0 0
    %2044 = vmatpush1.bf16.msra.mxu0 %v1541
    %2045 = vmatprep.subr.bf16.mxu0 0
    %2046 = vmatpush1.bf16.msra.mxu0 %v1542
    %2047 = vmatprep.subr.bf16.mxu0 0
    %2048 = vmatpush1.bf16.msra.mxu0 %v1543
    %2049 = vmatprep.subr.bf16.mxu0 0
    %2050 = vmatpush1.bf16.msra.mxu0 %v1544
    %2051 = vmatprep.subr.bf16.mxu0 0
    %2052 = vmatpush1.bf16.msra.mxu0 %v1545
    %2053 = vmatprep.subr.bf16.mxu0 0
    %2054 = vmatpush1.bf16.msra.mxu0 %v1546
    %2055 = vmatprep.subr.bf16.mxu0 0
    %2056 = vmatpush1.bf16.msra.mxu0 %v1547
    %2057 = vmatprep.subr.bf16.mxu0 0
    %2058 = vmatpush1.bf16.msra.mxu0 %v1548
    %2059 = vmatprep.subr.bf16.mxu0 0
    %2060 = vmatpush1.bf16.msra.mxu0 %v1549
    %2061 = vmatprep.subr.bf16.mxu0 0
    %2062 = vmatpush1.bf16.msra.mxu0 %v1550
    %2063 = vmatprep.subr.bf16.mxu0 0
    %2064 = vmatpush1.bf16.msra.mxu0 %v1551
    %2065 = vmatprep.subr.bf16.mxu0 0
    %2066 = vmatpush1.bf16.msra.mxu0 %v1552
    %2067 = vmatprep.subr.bf16.mxu0 0
    %2068 = vmatpush1.bf16.msra.mxu0 %v1553
    %2069 = vmatprep.subr.bf16.mxu0 0
    %2070 = vmatpush1.bf16.msra.mxu0 %v1554
    %2071 = vmatprep.subr.bf16.mxu0 0
    %2072 = vmatpush1.bf16.msra.mxu0 %v1555
    %2073 = vmatprep.subr.bf16.mxu0 0
    %2074 = vmatpush1.bf16.msra.mxu0 %v1556
    %2075 = vmatprep.mubr.bf16.mxu0 %v135
    %2076 = vmatmul.mubr.bf16.gmra.mrb[0].mxu0 %v134
    %v2077 = vpop.f32.mrb[0].mxu0
    %v2078 = vadd.f32 %v2038, %v2077
    %v2079 = vpop.f32.mrb[0].mxu0
    %v2080 = vpop.f32.mrb[0].mxu0
    %v2081 = vpop.f32.mrb[0].mxu0
    %2082 = vdwg.mxu0
    %2083 = vmatprep.subr.bf16.mxu0 0
    %2084 = vmatpush1.bf16.msra.mxu0 %v1557
    %2085 = vmatprep.subr.bf16.mxu0 0
    %2086 = vmatpush1.bf16.msra.mxu0 %v1558
    %2087 = vmatprep.subr.bf16.mxu0 0
    %2088 = vmatpush1.bf16.msra.mxu0 %v1559
    %2089 = vmatprep.subr.bf16.mxu0 0
    %2090 = vmatpush1.bf16.msra.mxu0 %v1560
    %2091 = vmatprep.subr.bf16.mxu0 0
    %2092 = vmatpush1.bf16.msra.mxu0 %v1561
    %2093 = vmatprep.subr.bf16.mxu0 0
    %2094 = vmatpush1.bf16.msra.mxu0 %v1562
    %2095 = vmatprep.subr.bf16.mxu0 0
    %2096 = vmatpush1.bf16.msra.mxu0 %v1563
    %2097 = vmatprep.subr.bf16.mxu0 0
    %2098 = vmatpush1.bf16.msra.mxu0 %v1564
    %2099 = vmatprep.subr.bf16.mxu0 0
    %2100 = vmatpush1.bf16.msra.mxu0 %v1565
    %2101 = vmatprep.subr.bf16.mxu0 0
    %2102 = vmatpush1.bf16.msra.mxu0 %v1566
    %2103 = vmatprep.subr.bf16.mxu0 0
    %2104 = vmatpush1.bf16.msra.mxu0 %v1567
    %2105 = vmatprep.subr.bf16.mxu0 0
    %2106 = vmatpush1.bf16.msra.mxu0 %v1568
    %2107 = vmatprep.subr.bf16.mxu0 0
    %2108 = vmatpush1.bf16.msra.mxu0 %v1569
    %2109 = vmatprep.subr.bf16.mxu0 0
    %2110 = vmatpush1.bf16.msra.mxu0 %v1570
    %2111 = vmatprep.subr.bf16.mxu0 0
    %2112 = vmatpush1.bf16.msra.mxu0 %v1571
    %2113 = vmatprep.subr.bf16.mxu0 0
    %2114 = vmatpush1.bf16.msra.mxu0 %v1572
    %2115 = vmatprep.mubr.bf16.mxu0 %v137
    %2116 = vmatmul.mubr.bf16.gmra.mrb[0].mxu0 %v136
    %v2117 = vpop.f32.mrb[0].mxu0
    %v2118 = vadd.f32 %v2078, %v2117
    %v2119 = vpop.f32.mrb[0].mxu0
    %v2120 = vpop.f32.mrb[0].mxu0
    %v2121 = vpop.f32.mrb[0].mxu0
    %2122 = vdwg.mxu0
    %2123 = vmatprep.subr.bf16.mxu0 0
    %2124 = vmatpush1.bf16.msra.mxu0 %v1573
    %2125 = vmatprep.subr.bf16.mxu0 0
    %2126 = vmatpush1.bf16.msra.mxu0 %v1574
    %2127 = vmatprep.subr.bf16.mxu0 0
    %2128 = vmatpush1.bf16.msra.mxu0 %v1575
    %2129 = vmatprep.subr.bf16.mxu0 0
    %2130 = vmatpush1.bf16.msra.mxu0 %v1576
    %2131 = vmatprep.subr.bf16.mxu0 0
    %2132 = vmatpush1.bf16.msra.mxu0 %v1577
    %2133 = vmatprep.subr.bf16.mxu0 0
    %2134 = vmatpush1.bf16.msra.mxu0 %v1578
    %2135 = vmatprep.subr.bf16.mxu0 0
    %2136 = vmatpush1.bf16.msra.mxu0 %v1579
    %2137 = vmatprep.subr.bf16.mxu0 0
    %2138 = vmatpush1.bf16.msra.mxu0 %v1580
    %2139 = vmatprep.subr.bf16.mxu0 0
    %2140 = vmatpush1.bf16.msra.mxu0 %v1581
    %2141 = vmatprep.subr.bf16.mxu0 0
    %2142 = vmatpush1.bf16.msra.mxu0 %v1582
    %2143 = vmatprep.subr.bf16.mxu0 0
    %2144 = vmatpush1.bf16.msra.mxu0 %v1583
    %2145 = vmatprep.subr.bf16.mxu0 0
    %2146 = vmatpush1.bf16.msra.mxu0 %v1584
    %2147 = vmatprep.subr.bf16.mxu0 0
    %2148 = vmatpush1.bf16.msra.mxu0 %v1585
    %2149 = vmatprep.subr.bf16.mxu0 0
    %2150 = vmatpush1.bf16.msra.mxu0 %v1586
    %2151 = vmatprep.subr.bf16.mxu0 0
    %2152 = vmatpush1.bf16.msra.mxu0 %v1587
    %2153 = vmatprep.subr.bf16.mxu0 0
    %2154 = vmatpush1.bf16.msra.mxu0 %v1588
    %2155 = vmatprep.mubr.bf16.mxu0 %v139
    %2156 = vmatmul.mubr.bf16.gmra.mrb[0].mxu0 %v138
    %v2157 = vpop.f32.mrb[0].mxu0
    %v2158 = vadd.f32 %v2118, %v2157
    %v2159 = vpop.f32.mrb[0].mxu0
    %v2160 = vpop.f32.mrb[0].mxu0
    %v2161 = vpop.f32.mrb[0].mxu0
    %2162 = vdwg.mxu0
    %2163 = vmatprep.subr.bf16.mxu0 0
    %2164 = vmatpush1.bf16.msra.mxu0 %v1589
    %2165 = vmatprep.subr.bf16.mxu0 0
    %2166 = vmatpush1.bf16.msra.mxu0 %v1590
    %2167 = vmatprep.subr.bf16.mxu0 0
    %2168 = vmatpush1.bf16.msra.mxu0 %v1591
    %2169 = vmatprep.subr.bf16.mxu0 0
    %2170 = vmatpush1.bf16.msra.mxu0 %v1592
    %2171 = vmatprep.subr.bf16.mxu0 0
    %2172 = vmatpush1.bf16.msra.mxu0 %v1593
    %2173 = vmatprep.subr.bf16.mxu0 0
    %2174 = vmatpush1.bf16.msra.mxu0 %v1594
    %2175 = vmatprep.subr.bf16.mxu0 0
    %2176 = vmatpush1.bf16.msra.mxu0 %v1595
    %2177 = vmatprep.subr.bf16.mxu0 0
    %2178 = vmatpush1.bf16.msra.mxu0 %v1596
    %2179 = vmatprep.subr.bf16.mxu0 0
    %2180 = vmatpush1.bf16.msra.mxu0 %v1597
    %2181 = vmatprep.subr.bf16.mxu0 0
    %2182 = vmatpush1.bf16.msra.mxu0 %v1598
    %2183 = vmatprep.subr.bf16.mxu0 0
    %2184 = vmatpush1.bf16.msra.mxu0 %v1599
    %2185 = vmatprep.subr.bf16.mxu0 0
    %2186 = vmatpush1.bf16.msra.mxu0 %v1600
    %2187 = vmatprep.subr.bf16.mxu0 0
    %2188 = vmatpush1.bf16.msra.mxu0 %v1601
    %2189 = vmatprep.subr.bf16.mxu0 0
    %2190 = vmatpush1.bf16.msra.mxu0 %v1602
    %2191 = vmatprep.subr.bf16.mxu0 0
    %2192 = vmatpush1.bf16.msra.mxu0 %v1603
    %2193 = vmatprep.subr.bf16.mxu0 0
    %2194 = vmatpush1.bf16.msra.mxu0 %v1604
    %2195 = vmatprep.mubr.bf16.mxu0 %v141
    %2196 = vmatmul.mubr.bf16.gmra.mrb[0].mxu0 %v140
    %v2197 = vpop.f32.mrb[0].mxu0
    %v2198 = vadd.f32 %v2158, %v2197
    %v2199 = vpop.f32.mrb[0].mxu0
    %v2200 = vpop.f32.mrb[0].mxu0
    %v2201 = vpop.f32.mrb[0].mxu0
    %2202 = vdwg.mxu0
    %2203 = vmatprep.subr.bf16.mxu0 0
    %2204 = vmatpush1.bf16.msra.mxu0 %v1605
    %2205 = vmatprep.subr.bf16.mxu0 0
    %2206 = vmatpush1.bf16.msra.mxu0 %v1606
    %2207 = vmatprep.subr.bf16.mxu0 0
    %2208 = vmatpush1.bf16.msra.mxu0 %v1607
    %2209 = vmatprep.subr.bf16.mxu0 0
    %2210 = vmatpush1.bf16.msra.mxu0 %v1608
    %2211 = vmatprep.subr.bf16.mxu0 0
    %2212 = vmatpush1.bf16.msra.mxu0 %v1609
    %2213 = vmatprep.subr.bf16.mxu0 0
    %2214 = vmatpush1.bf16.msra.mxu0 %v1610
    %2215 = vmatprep.subr.bf16.mxu0 0
    %2216 = vmatpush1.bf16.msra.mxu0 %v1611
    %2217 = vmatprep.subr.bf16.mxu0 0
    %2218 = vmatpush1.bf16.msra.mxu0 %v1612
    %2219 = vmatprep.subr.bf16.mxu0 0
    %2220 = vmatpush1.bf16.msra.mxu0 %v1613
    %2221 = vmatprep.subr.bf16.mxu0 0
    %2222 = vmatpush1.bf16.msra.mxu0 %v1614
    %2223 = vmatprep.subr.bf16.mxu0 0
    %2224 = vmatpush1.bf16.msra.mxu0 %v1615
    %2225 = vmatprep.subr.bf16.mxu0 0
    %2226 = vmatpush1.bf16.msra.mxu0 %v1616
    %2227 = vmatprep.subr.bf16.mxu0 0
    %2228 = vmatpush1.bf16.msra.mxu0 %v1617
    %2229 = vmatprep.subr.bf16.mxu0 0
    %2230 = vmatpush1.bf16.msra.mxu0 %v1618
    %2231 = vmatprep.subr.bf16.mxu0 0
    %2232 = vmatpush1.bf16.msra.mxu0 %v1619
    %2233 = vmatprep.subr.bf16.mxu0 0
    %2234 = vmatpush1.bf16.msra.mxu0 %v1620
    %2235 = vmatprep.mubr.bf16.mxu0 %v143
    %2236 = vmatmul.mubr.bf16.gmra.mrb[0].mxu0 %v142
    %v2237 = vpop.f32.mrb[0].mxu0
    %v2238 = vadd.f32 %v2198, %v2237
    %v2239 = vpop.f32.mrb[0].mxu0
    %v2240 = vpop.f32.mrb[0].mxu0
    %v2241 = vpop.f32.mrb[0].mxu0
    %2242 = vdwg.mxu0
    %2243 = vmatprep.subr.bf16.mxu0 0
    %2244 = vmatpush1.bf16.msra.mxu0 %v1621
    %2245 = vmatprep.subr.bf16.mxu0 0
    %2246 = vmatpush1.bf16.msra.mxu0 %v1622
    %2247 = vmatprep.subr.bf16.mxu0 0
    %2248 = vmatpush1.bf16.msra.mxu0 %v1623
    %2249 = vmatprep.subr.bf16.mxu0 0
    %2250 = vmatpush1.bf16.msra.mxu0 %v1624
    %2251 = vmatprep.subr.bf16.mxu0 0
    %2252 = vmatpush1.bf16.msra.mxu0 %v1625
    %2253 = vmatprep.subr.bf16.mxu0 0
    %2254 = vmatpush1.bf16.msra.mxu0 %v1626
    %2255 = vmatprep.subr.bf16.mxu0 0
    %2256 = vmatpush1.bf16.msra.mxu0 %v1627
    %2257 = vmatprep.subr.bf16.mxu0 0
    %2258 = vmatpush1.bf16.msra.mxu0 %v1628
    %2259 = vmatprep.subr.bf16.mxu0 0
    %2260 = vmatpush1.bf16.msra.mxu0 %v1629
    %2261 = vmatprep.subr.bf16.mxu0 0
    %2262 = vmatpush1.bf16.msra.mxu0 %v1630
    %2263 = vmatprep.subr.bf16.mxu0 0
    %2264 = vmatpush1.bf16.msra.mxu0 %v1631
    %2265 = vmatprep.subr.bf16.mxu0 0
    %2266 = vmatpush1.bf16.msra.mxu0 %v1632
    %2267 = vmatprep.subr.bf16.mxu0 0
    %2268 = vmatpush1.bf16.msra.mxu0 %v1633
    %2269 = vmatprep.subr.bf16.mxu0 0
    %2270 = vmatpush1.bf16.msra.mxu0 %v1634
    %2271 = vmatprep.subr.bf16.mxu0 0
    %2272 = vmatpush1.bf16.msra.mxu0 %v1635
    %2273 = vmatprep.subr.bf16.mxu0 0
    %2274 = vmatpush1.bf16.msra.mxu0 %v1636
    %2275 = vmatprep.mubr.bf16.mxu0 %v145
    %2276 = vmatmul.mubr.bf16.gmra.mrb[0].mxu0 %v144
    %v2277 = vpop.f32.mrb[0].mxu0
    %v2278 = vadd.f32 %v2238, %v2277
    %v2279 = vpop.f32.mrb[0].mxu0
    %v2280 = vpop.f32.mrb[0].mxu0
    %v2281 = vpop.f32.mrb[0].mxu0
    %2282 = vdwg.mxu0
    %2283 = vmatprep.subr.bf16.mxu0 0
    %2284 = vmatpush1.bf16.msra.mxu0 %v1637
    %2285 = vmatprep.subr.bf16.mxu0 0
    %2286 = vmatpush1.bf16.msra.mxu0 %v1638
    %2287 = vmatprep.subr.bf16.mxu0 0
    %2288 = vmatpush1.bf16.msra.mxu0 %v1639
    %2289 = vmatprep.subr.bf16.mxu0 0
    %2290 = vmatpush1.bf16.msra.mxu0 %v1640
    %2291 = vmatprep.subr.bf16.mxu0 0
    %2292 = vmatpush1.bf16.msra.mxu0 %v1641
    %2293 = vmatprep.subr.bf16.mxu0 0
    %2294 = vmatpush1.bf16.msra.mxu0 %v1642
    %2295 = vmatprep.subr.bf16.mxu0 0
    %2296 = vmatpush1.bf16.msra.mxu0 %v1643
    %2297 = vmatprep.subr.bf16.mxu0 0
    %2298 = vmatpush1.bf16.msra.mxu0 %v1644
    %2299 = vmatprep.subr.bf16.mxu0 0
    %2300 = vmatpush1.bf16.msra.mxu0 %v1645
    %2301 = vmatprep.subr.bf16.mxu0 0
    %2302 = vmatpush1.bf16.msra.mxu0 %v1646
    %2303 = vmatprep.subr.bf16.mxu0 0
    %2304 = vmatpush1.bf16.msra.mxu0 %v1647
    %2305 = vmatprep.subr.bf16.mxu0 0
    %2306 = vmatpush1.bf16.msra.mxu0 %v1648
    %2307 = vmatprep.subr.bf16.mxu0 0
    %2308 = vmatpush1.bf16.msra.mxu0 %v1649
    %2309 = vmatprep.subr.bf16.mxu0 0
    %2310 = vmatpush1.bf16.msra.mxu0 %v1650
    %2311 = vmatprep.subr.bf16.mxu0 0
    %2312 = vmatpush1.bf16.msra.mxu0 %v1651
    %2313 = vmatprep.subr.bf16.mxu0 0
    %2314 = vmatpush1.bf16.msra.mxu0 %v1652
    %2315 = vmatprep.mubr.bf16.mxu0 %v147
    %2316 = vmatmul.mubr.bf16.gmra.mrb[0].mxu0 %v146
    %v2317 = vpop.f32.mrb[0].mxu0
    %v2318 = vadd.f32 %v2278, %v2317
    %v2319 = vpop.f32.mrb[0].mxu0
    %v2320 = vpop.f32.mrb[0].mxu0
    %v2321 = vpop.f32.mrb[0].mxu0
    %2322 = vdwg.mxu0
    %2323 = vmatprep.subr.bf16.mxu0 0
    %2324 = vmatpush1.bf16.msra.mxu0 %v1653
    %2325 = vmatprep.subr.bf16.mxu0 0
    %2326 = vmatpush1.bf16.msra.mxu0 %v1654
    %2327 = vmatprep.subr.bf16.mxu0 0
    %2328 = vmatpush1.bf16.msra.mxu0 %v1655
    %2329 = vmatprep.subr.bf16.mxu0 0
    %2330 = vmatpush1.bf16.msra.mxu0 %v1656
    %2331 = vmatprep.subr.bf16.mxu0 0
    %2332 = vmatpush1.bf16.msra.mxu0 %v1657
    %2333 = vmatprep.subr.bf16.mxu0 0
    %2334 = vmatpush1.bf16.msra.mxu0 %v1658
    %2335 = vmatprep.subr.bf16.mxu0 0
    %2336 = vmatpush1.bf16.msra.mxu0 %v1659
    %2337 = vmatprep.subr.bf16.mxu0 0
    %2338 = vmatpush1.bf16.msra.mxu0 %v1660
    %2339 = vmatprep.subr.bf16.mxu0 0
    %2340 = vmatpush1.bf16.msra.mxu0 %v1661
    %2341 = vmatprep.subr.bf16.mxu0 0
    %2342 = vmatpush1.bf16.msra.mxu0 %v1662
    %2343 = vmatprep.subr.bf16.mxu0 0
    %2344 = vmatpush1.bf16.msra.mxu0 %v1663
    %2345 = vmatprep.subr.bf16.mxu0 0
    %2346 = vmatpush1.bf16.msra.mxu0 %v1664
    %2347 = vmatprep.subr.bf16.mxu0 0
    %2348 = vmatpush1.bf16.msra.mxu0 %v1665
    %2349 = vmatprep.subr.bf16.mxu0 0
    %2350 = vmatpush1.bf16.msra.mxu0 %v1666
    %2351 = vmatprep.subr.bf16.mxu0 0
    %2352 = vmatpush1.bf16.msra.mxu0 %v1667
    %2353 = vmatprep.subr.bf16.mxu0 0
    %2354 = vmatpush1.bf16.msra.mxu0 %v1668
    %2355 = vmatprep.mubr.bf16.mxu0 %v149
    %2356 = vmatmul.mubr.bf16.gmra.mrb[0].mxu0 %v148
    %v2357 = vpop.f32.mrb[0].mxu0
    %v2358 = vadd.f32 %v2318, %v2357
    %v2359 = vpop.f32.mrb[0].mxu0
    %v2360 = vpop.f32.mrb[0].mxu0
    %v2361 = vpop.f32.mrb[0].mxu0
    %2362 = vdwg.mxu0
    %2363 = vmatprep.subr.bf16.mxu0 0
    %2364 = vmatpush1.bf16.msra.mxu0 %v1669
    %2365 = vmatprep.subr.bf16.mxu0 0
    %2366 = vmatpush1.bf16.msra.mxu0 %v1670
    %2367 = vmatprep.subr.bf16.mxu0 0
    %2368 = vmatpush1.bf16.msra.mxu0 %v1671
    %2369 = vmatprep.subr.bf16.mxu0 0
    %2370 = vmatpush1.bf16.msra.mxu0 %v1672
    %2371 = vmatprep.subr.bf16.mxu0 0
    %2372 = vmatpush1.bf16.msra.mxu0 %v1673
    %2373 = vmatprep.subr.bf16.mxu0 0
    %2374 = vmatpush1.bf16.msra.mxu0 %v1674
    %2375 = vmatprep.subr.bf16.mxu0 0
    %2376 = vmatpush1.bf16.msra.mxu0 %v1675
    %2377 = vmatprep.subr.bf16.mxu0 0
    %2378 = vmatpush1.bf16.msra.mxu0 %v1676
    %2379 = vmatprep.subr.bf16.mxu0 0
    %2380 = vmatpush1.bf16.msra.mxu0 %v1677
    %2381 = vmatprep.subr.bf16.mxu0 0
    %2382 = vmatpush1.bf16.msra.mxu0 %v1678
    %2383 = vmatprep.subr.bf16.mxu0 0
    %2384 = vmatpush1.bf16.msra.mxu0 %v1679
    %2385 = vmatprep.subr.bf16.mxu0 0
    %2386 = vmatpush1.bf16.msra.mxu0 %v1680
    %2387 = vmatprep.subr.bf16.mxu0 0
    %2388 = vmatpush1.bf16.msra.mxu0 %v1681
    %2389 = vmatprep.subr.bf16.mxu0 0
    %2390 = vmatpush1.bf16.msra.mxu0 %v1682
    %2391 = vmatprep.subr.bf16.mxu0 0
    %2392 = vmatpush1.bf16.msra.mxu0 %v1683
    %2393 = vmatprep.subr.bf16.mxu0 0
    %2394 = vmatpush1.bf16.msra.mxu0 %v1684
    %2395 = vmatprep.mubr.bf16.mxu0 %v151
    %2396 = vmatmul.mubr.bf16.gmra.mrb[0].mxu0 %v150
    %v2397 = vpop.f32.mrb[0].mxu0
    %v2398 = vadd.f32 %v2358, %v2397
    %v2399 = vpop.f32.mrb[0].mxu0
    %v2400 = vpop.f32.mrb[0].mxu0
    %v2401 = vpop.f32.mrb[0].mxu0
    %2402 = vdwg.mxu0
    %2403 = vmatprep.subr.bf16.mxu0 0
    %2404 = vmatpush1.bf16.msra.mxu0 %v1685
    %2405 = vmatprep.subr.bf16.mxu0 0
    %2406 = vmatpush1.bf16.msra.mxu0 %v1686
    %2407 = vmatprep.subr.bf16.mxu0 0
    %2408 = vmatpush1.bf16.msra.mxu0 %v1687
    %2409 = vmatprep.subr.bf16.mxu0 0
    %2410 = vmatpush1.bf16.msra.mxu0 %v1688
    %2411 = vmatprep.subr.bf16.mxu0 0
    %2412 = vmatpush1.bf16.msra.mxu0 %v1689
    %2413 = vmatprep.subr.bf16.mxu0 0
    %2414 = vmatpush1.bf16.msra.mxu0 %v1690
    %2415 = vmatprep.subr.bf16.mxu0 0
    %2416 = vmatpush1.bf16.msra.mxu0 %v1691
    %2417 = vmatprep.subr.bf16.mxu0 0
    %2418 = vmatpush1.bf16.msra.mxu0 %v1692
    %2419 = vmatprep.subr.bf16.mxu0 0
    %2420 = vmatpush1.bf16.msra.mxu0 %v1693
    %2421 = vmatprep.subr.bf16.mxu0 0
    %2422 = vmatpush1.bf16.msra.mxu0 %v1694
    %2423 = vmatprep.subr.bf16.mxu0 0
    %2424 = vmatpush1.bf16.msra.mxu0 %v1695
    %2425 = vmatprep.subr.bf16.mxu0 0
    %2426 = vmatpush1.bf16.msra.mxu0 %v1696
    %2427 = vmatprep.subr.bf16.mxu0 0
    %2428 = vmatpush1.bf16.msra.mxu0 %v1697
    %2429 = vmatprep.subr.bf16.mxu0 0
    %2430 = vmatpush1.bf16.msra.mxu0 %v1698
    %2431 = vmatprep.subr.bf16.mxu0 0
    %2432 = vmatpush1.bf16.msra.mxu0 %v1699
    %2433 = vmatprep.subr.bf16.mxu0 0
    %2434 = vmatpush1.bf16.msra.mxu0 %v1700
    %2435 = vmatprep.mubr.bf16.mxu0 %v153
    %2436 = vmatmul.mubr.bf16.gmra.mrb[0].mxu0 %v152
    %v2437 = vpop.f32.mrb[0].mxu0
    %v2438 = vadd.f32 %v2398, %v2437
    %v2439 = vpop.f32.mrb[0].mxu0
    %v2440 = vpop.f32.mrb[0].mxu0
    %v2441 = vpop.f32.mrb[0].mxu0
    %2442 = vdwg.mxu0
    %2443 = vmatprep.subr.bf16.mxu0 0
    %2444 = vmatpush1.bf16.msra.mxu0 %v1701
    %2445 = vmatprep.subr.bf16.mxu0 0
    %2446 = vmatpush1.bf16.msra.mxu0 %v1702
    %2447 = vmatprep.subr.bf16.mxu0 0
    %2448 = vmatpush1.bf16.msra.mxu0 %v1703
    %2449 = vmatprep.subr.bf16.mxu0 0
    %2450 = vmatpush1.bf16.msra.mxu0 %v1704
    %2451 = vmatprep.subr.bf16.mxu0 0
    %2452 = vmatpush1.bf16.msra.mxu0 %v1705
    %2453 = vmatprep.subr.bf16.mxu0 0
    %2454 = vmatpush1.bf16.msra.mxu0 %v1706
    %2455 = vmatprep.subr.bf16.mxu0 0
    %2456 = vmatpush1.bf16.msra.mxu0 %v1707
    %2457 = vmatprep.subr.bf16.mxu0 0
    %2458 = vmatpush1.bf16.msra.mxu0 %v1708
    %2459 = vmatprep.subr.bf16.mxu0 0
    %2460 = vmatpush1.bf16.msra.mxu0 %v1709
    %2461 = vmatprep.subr.bf16.mxu0 0
    %2462 = vmatpush1.bf16.msra.mxu0 %v1710
    %2463 = vmatprep.subr.bf16.mxu0 0
    %2464 = vmatpush1.bf16.msra.mxu0 %v1711
    %2465 = vmatprep.subr.bf16.mxu0 0
    %2466 = vmatpush1.bf16.msra.mxu0 %v1712
    %2467 = vmatprep.subr.bf16.mxu0 0
    %2468 = vmatpush1.bf16.msra.mxu0 %v1713
    %2469 = vmatprep.subr.bf16.mxu0 0
    %2470 = vmatpush1.bf16.msra.mxu0 %v1714
    %2471 = vmatprep.subr.bf16.mxu0 0
    %2472 = vmatpush1.bf16.msra.mxu0 %v1715
    %2473 = vmatprep.subr.bf16.mxu0 0
    %2474 = vmatpush1.bf16.msra.mxu0 %v1716
    %2475 = vmatprep.mubr.bf16.mxu0 %v155
    %2476 = vmatmul.mubr.bf16.gmra.mrb[0].mxu0 %v154
    %v2477 = vpop.f32.mrb[0].mxu0
    %v2478 = vadd.f32 %v2438, %v2477
    %v2479 = vpop.f32.mrb[0].mxu0
    %v2480 = vpop.f32.mrb[0].mxu0
    %v2481 = vpop.f32.mrb[0].mxu0
    %2482 = vdwg.mxu0
    %2483 = vmatprep.subr.bf16.mxu0 0
    %2484 = vmatpush1.bf16.msra.mxu0 %v1717
    %2485 = vmatprep.subr.bf16.mxu0 0
    %2486 = vmatpush1.bf16.msra.mxu0 %v1718
    %2487 = vmatprep.subr.bf16.mxu0 0
    %2488 = vmatpush1.bf16.msra.mxu0 %v1719
    %2489 = vmatprep.subr.bf16.mxu0 0
    %2490 = vmatpush1.bf16.msra.mxu0 %v1720
    %2491 = vmatprep.subr.bf16.mxu0 0
    %2492 = vmatpush1.bf16.msra.mxu0 %v1721
    %2493 = vmatprep.subr.bf16.mxu0 0
    %2494 = vmatpush1.bf16.msra.mxu0 %v1722
    %2495 = vmatprep.subr.bf16.mxu0 0
    %2496 = vmatpush1.bf16.msra.mxu0 %v1723
    %2497 = vmatprep.subr.bf16.mxu0 0
    %2498 = vmatpush1.bf16.msra.mxu0 %v1724
    %2499 = vmatprep.subr.bf16.mxu0 0
    %2500 = vmatpush1.bf16.msra.mxu0 %v1725
    %2501 = vmatprep.subr.bf16.mxu0 0
    %2502 = vmatpush1.bf16.msra.mxu0 %v1726
    %2503 = vmatprep.subr.bf16.mxu0 0
    %2504 = vmatpush1.bf16.msra.mxu0 %v1727
    %2505 = vmatprep.subr.bf16.mxu0 0
    %2506 = vmatpush1.bf16.msra.mxu0 %v1728
    %2507 = vmatprep.subr.bf16.mxu0 0
    %2508 = vmatpush1.bf16.msra.mxu0 %v1729
    %2509 = vmatprep.subr.bf16.mxu0 0
    %2510 = vmatpush1.bf16.msra.mxu0 %v1730
    %2511 = vmatprep.subr.bf16.mxu0 0
    %2512 = vmatpush1.bf16.msra.mxu0 %v1731
    %2513 = vmatprep.subr.bf16.mxu0 0
    %2514 = vmatpush1.bf16.msra.mxu0 %v1732
    %2515 = vmatprep.mubr.bf16.mxu0 %v157
    %2516 = vmatmul.mubr.bf16.gmra.mrb[0].mxu0 %v156
    %v2517 = vpop.f32.mrb[0].mxu0
    %v2518 = vadd.f32 %v2478, %v2517
    %v2519 = vpop.f32.mrb[0].mxu0
    %v2520 = vpop.f32.mrb[0].mxu0
    %v2521 = vpop.f32.mrb[0].mxu0
    %2522 = vdwg.mxu0
    %2523 = vmatprep.subr.bf16.mxu0 0
    %2524 = vmatpush1.bf16.msra.mxu0 %v1733
    %2525 = vmatprep.subr.bf16.mxu0 0
    %2526 = vmatpush1.bf16.msra.mxu0 0
    %2527 = vmatprep.subr.bf16.mxu0 0
    %2528 = vmatpush1.bf16.msra.mxu0 0
    %2529 = vmatprep.subr.bf16.mxu0 0
    %2530 = vmatpush1.bf16.msra.mxu0 0
    %2531 = vmatprep.subr.bf16.mxu0 0
    %2532 = vmatpush1.bf16.msra.mxu0 0
    %2533 = vmatprep.subr.bf16.mxu0 0
    %2534 = vmatpush1.bf16.msra.mxu0 0
    %2535 = vmatprep.subr.bf16.mxu0 0
    %2536 = vmatpush1.bf16.msra.mxu0 0
    %2537 = vmatprep.subr.bf16.mxu0 0
    %2538 = vmatpush1.bf16.msra.mxu0 0
    %2539 = vmatprep.subr.bf16.mxu0 0
    %2540 = vmatpush1.bf16.msra.mxu0 0
    %2541 = vmatprep.subr.bf16.mxu0 0
    %2542 = vmatpush1.bf16.msra.mxu0 0
    %2543 = vmatprep.subr.bf16.mxu0 0
    %2544 = vmatpush1.bf16.msra.mxu0 0
    %2545 = vmatprep.subr.bf16.mxu0 0
    %2546 = vmatpush1.bf16.msra.mxu0 0
    %2547 = vmatprep.subr.bf16.mxu0 0
    %2548 = vmatpush1.bf16.msra.mxu0 0
    %2549 = vmatprep.subr.bf16.mxu0 0
    %2550 = vmatpush1.bf16.msra.mxu0 0
    %2551 = vmatprep.subr.bf16.mxu0 0
    %2552 = vmatpush1.bf16.msra.mxu0 0
    %2553 = vmatprep.subr.bf16.mxu0 0
    %2554 = vmatpush1.bf16.msra.mxu0 0
    %2555 = vmatprep.mubr.bf16.mxu0 0
    %2556 = vmatmul.mubr.bf16.gmra.mrb[0].mxu0 %v1961
    %v2557 = vpop.f32.mrb[0].mxu0
    %v2558 = vadd.f32 %v2518, %v2557
    %v2559 = vpop.f32.mrb[0].mxu0
    %v2560 = vpop.f32.mrb[0].mxu0
    %v2561 = vpop.f32.mrb[0].mxu0
    %2562 = vdwg.mxu0
    %v2563 = vld [vmem:[%s2] sm:$0x1]
    %v2565 = vlaneseq
    %v2566 = vshrl.u32 %v2565, 7
    %v2567 = vsub.s32 0, %v2566
    %v2568 = vrot.slane %v2563, %v2567
    %v2570 = vadd.f32 %v2568, %v2558
    %v2572 = vrot.slane %v2558, 2
    %2573 = vrot.lane.b32.xlu0 %v2572, 64
    %v2574 = vpop.permute.xlu0 %2573
    %v2576 = vadd.f32 %v2570, %v2574
    %v2577 = vmax.f32 %v2576, 0.0
    %v2578 = vld [vmem:[%s3] sm:$0x1]
    %v2579 = vld [vmem:[%s4] sm:$0x1]
    %vm2580 = vcmask 517120
    %v2581 = vsel %vm2580, %v2577, 0.0
    %2582 = vadd.xlane.f32.xlu0 %v2581
    %v2583 = vpop.xlane.xlu0 %2582
    %v2584 = vrcp.pop 64.0
    %v2585 = vmul.f32 %v2583, %v2584
    %v2586 = vsub.f32 %v2577, %v2585
    %v2587 = vmul.f32 %v2586, %v2586
    %v2588 = vsel %vm2580, %v2587, 0.0
    %2589 = vadd.xlane.f32.xlu0 %v2588
    %v2590 = vpop.xlane.xlu0 %2589
    %v2591 = vmul.f32 %v2590, %v2584
    %v2592 = vadd.f32 %v2591, 1e-05
    %v2593 = vrsqrt.pop %v2592
    %v2594 = vmul.f32 %v2586, %v2593
    %v2596 = vlaneseq
    %v2597 = vshrl.u32 %v2596, 7
    %v2598 = vsub.s32 0, %v2597
    %v2599 = vrot.slane %v2578, %v2598
    %v2601 = vmul.f32 %v2594, %v2599
    %v2603 = vlaneseq
    %v2604 = vshrl.u32 %v2603, 7
    %v2605 = vsub.s32 0, %v2604
    %v2606 = vrot.slane %v2579, %v2605
    %v2608 = vadd.f32 %v2601, %v2606
    %v2609 = vpack.c.bf16 %v2608, %v2608
    %v2610 = vld [vmem:[#allocation7] sm:$0xf]
    %v2611 = vld [vmem:[#allocation7 + $0x4] sm:$0xf]
    %v2612 = vld [vmem:[#allocation7 + $0x8] sm:$0xf]
    %v2613 = vld [vmem:[#allocation7 + $0xc] sm:$0xf]
    %v2614 = vld [vmem:[#allocation7 + $0x10] sm:$0xf]
    %v2615 = vld [vmem:[#allocation7 + $0x14] sm:$0xf]
    %v2616 = vld [vmem:[#allocation7 + $0x18] sm:$0xf]
    %v2617 = vld [vmem:[#allocation7 + $0x1c] sm:$0xf]
    %v2618 = vld [vmem:[%s6] sm:$0x1]
    %v2620 = vlaneseq
    %v2621 = vshrl.u32 %v2620, 7
    %v2622 = vsub.s32 0, %v2621
    %v2623 = vrot.slane %v2618, %v2622
    %v2633 = vunpack.c.l.b16 %v2610
    %v2634 = vunpack.c.l.b16 %v2611
    %v2635 = vunpack.c.l.b16 %v2612
    %v2636 = vunpack.c.l.b16 %v2613
    %v2637 = vunpack.c.l.b16 %v2614
    %v2638 = vunpack.c.l.b16 %v2615
    %v2639 = vunpack.c.l.b16 %v2616
    %v2640 = vunpack.c.l.b16 %v2617
    %v2641 = vpack.c.b16 %v2634, %v2633
    %v2642 = vpack.c.b16 %v2636, %v2635
    %v2643 = vpack.c.b16 %v2638, %v2637
    %v2644 = vpack.c.b16 %v2640, %v2639
    %vm2649 = vcmask 523264
    %v2651 = vsel %vm2649, %v2609, 0
    %2653 = vmatprep.subr.bf16.mxu0 0
    %2654 = vmatpush1.bf16.msra.mxu0 %v2641
    %2655 = vmatprep.subr.bf16.mxu0 0
    %2656 = vmatpush1.bf16.msra.mxu0 %v2642
    %2657 = vmatprep.subr.bf16.mxu0 0
    %2658 = vmatpush1.bf16.msra.mxu0 %v2643
    %2659 = vmatprep.subr.bf16.mxu0 0
    %2660 = vmatpush1.bf16.msra.mxu0 %v2644
    %2661 = vmatprep.subr.bf16.mxu0 0
    %2662 = vmatpush1.bf16.msra.mxu0 0
    %2663 = vmatprep.subr.bf16.mxu0 0
    %2664 = vmatpush1.bf16.msra.mxu0 0
    %2665 = vmatprep.subr.bf16.mxu0 0
    %2666 = vmatpush1.bf16.msra.mxu0 0
    %2667 = vmatprep.subr.bf16.mxu0 0
    %2668 = vmatpush1.bf16.msra.mxu0 0
    %2669 = vmatprep.subr.bf16.mxu0 0
    %2670 = vmatpush1.bf16.msra.mxu0 0
    %2671 = vmatprep.subr.bf16.mxu0 0
    %2672 = vmatpush1.bf16.msra.mxu0 0
    %2673 = vmatprep.subr.bf16.mxu0 0
    %2674 = vmatpush1.bf16.msra.mxu0 0
    %2675 = vmatprep.subr.bf16.mxu0 0
    %2676 = vmatpush1.bf16.msra.mxu0 0
    %2677 = vmatprep.subr.bf16.mxu0 0
    %2678 = vmatpush1.bf16.msra.mxu0 0
    %2679 = vmatprep.subr.bf16.mxu0 0
    %2680 = vmatpush1.bf16.msra.mxu0 0
    %2681 = vmatprep.subr.bf16.mxu0 0
    %2682 = vmatpush1.bf16.msra.mxu0 0
    %2683 = vmatprep.subr.bf16.mxu0 0
    %2684 = vmatpush1.bf16.msra.mxu0 0
    %2685 = vmatprep.mubr.bf16.mxu0 0
    %2686 = vmatmul.mubr.bf16.gmra.mrb[0].mxu0 %v2651
    %v2687 = vpop.f32.mrb[0].mxu0
    %v2688 = vadd.f32 %v2623, %v2687
    %v2689 = vpop.f32.mrb[0].mxu0
    %v2690 = vpop.f32.mrb[0].mxu0
    %v2691 = vpop.f32.mrb[0].mxu0
    %2692 = vdwg.mxu0
    %v2693 = vmax.f32 %v2688, 0.0
    %v2694 = vld [vmem:[%s7] sm:$0x1]
    %v2695 = vld [vmem:[%s8] sm:$0x1]
    %v2696 = vsel %vm2580, %v2693, 0.0
    %2697 = vadd.xlane.f32.xlu0 %v2696
    %v2698 = vpop.xlane.xlu0 %2697
    %v2699 = vmul.f32 %v2698, %v2584
    %v2700 = vsub.f32 %v2693, %v2699
    %v2701 = vmul.f32 %v2700, %v2700
    %v2702 = vsel %vm2580, %v2701, 0.0
    %2703 = vadd.xlane.f32.xlu0 %v2702
    %v2704 = vpop.xlane.xlu0 %2703
    %v2705 = vmul.f32 %v2704, %v2584
    %v2706 = vadd.f32 %v2705, 1e-05
    %v2707 = vrsqrt.pop %v2706
    %v2708 = vmul.f32 %v2700, %v2707
    %v2710 = vlaneseq
    %v2711 = vshrl.u32 %v2710, 7
    %v2712 = vsub.s32 0, %v2711
    %v2713 = vrot.slane %v2694, %v2712
    %v2715 = vmul.f32 %v2708, %v2713
    %v2717 = vlaneseq
    %v2718 = vshrl.u32 %v2717, 7
    %v2719 = vsub.s32 0, %v2718
    %v2720 = vrot.slane %v2695, %v2719
    %v2722 = vadd.f32 %v2715, %v2720
    %v2723 = vpack.c.bf16 %v2722, %v2722
    %s2724 = scalar_lea.vmem [#allocation7], 32
    %v2725 = vld [vmem:[%s2724] sm:$0xf]
    %v2726 = vld [vmem:[%s2724 + $0x4] sm:$0xf]
    %v2727 = vld [vmem:[%s2724 + $0x8] sm:$0xf]
    %v2728 = vld [vmem:[%s2724 + $0xc] sm:$0xf]
    %v2729 = vld [vmem:[%s2724 + $0x10] sm:$0xf]
    %v2730 = vld [vmem:[%s2724 + $0x14] sm:$0xf]
    %v2731 = vld [vmem:[%s2724 + $0x18] sm:$0xf]
    %v2732 = vld [vmem:[%s2724 + $0x1c] sm:$0xf]
    %s2733 = scalar_lea.vmem %s6, 1
    %v2734 = vld [vmem:[%s2733] sm:$0x1]
    %v2736 = vlaneseq
    %v2737 = vshrl.u32 %v2736, 7
    %v2738 = vsub.s32 0, %v2737
    %v2739 = vrot.slane %v2734, %v2738
    %v2749 = vunpack.c.l.b16 %v2725
    %v2750 = vunpack.c.l.b16 %v2726
    %v2751 = vunpack.c.l.b16 %v2727
    %v2752 = vunpack.c.l.b16 %v2728
    %v2753 = vunpack.c.l.b16 %v2729
    %v2754 = vunpack.c.l.b16 %v2730
    %v2755 = vunpack.c.l.b16 %v2731
    %v2756 = vunpack.c.l.b16 %v2732
    %v2757 = vpack.c.b16 %v2750, %v2749
    %v2758 = vpack.c.b16 %v2752, %v2751
    %v2759 = vpack.c.b16 %v2754, %v2753
    %v2760 = vpack.c.b16 %v2756, %v2755
    %v2766 = vsel %vm2649, %v2723, 0
    %2768 = vmatprep.subr.bf16.mxu0 0
    %2769 = vmatpush1.bf16.msra.mxu0 %v2757
    %2770 = vmatprep.subr.bf16.mxu0 0
    %2771 = vmatpush1.bf16.msra.mxu0 %v2758
    %2772 = vmatprep.subr.bf16.mxu0 0
    %2773 = vmatpush1.bf16.msra.mxu0 %v2759
    %2774 = vmatprep.subr.bf16.mxu0 0
    %2775 = vmatpush1.bf16.msra.mxu0 %v2760
    %2776 = vmatprep.subr.bf16.mxu0 0
    %2777 = vmatpush1.bf16.msra.mxu0 0
    %2778 = vmatprep.subr.bf16.mxu0 0
    %2779 = vmatpush1.bf16.msra.mxu0 0
    %2780 = vmatprep.subr.bf16.mxu0 0
    %2781 = vmatpush1.bf16.msra.mxu0 0
    %2782 = vmatprep.subr.bf16.mxu0 0
    %2783 = vmatpush1.bf16.msra.mxu0 0
    %2784 = vmatprep.subr.bf16.mxu0 0
    %2785 = vmatpush1.bf16.msra.mxu0 0
    %2786 = vmatprep.subr.bf16.mxu0 0
    %2787 = vmatpush1.bf16.msra.mxu0 0
    %2788 = vmatprep.subr.bf16.mxu0 0
    %2789 = vmatpush1.bf16.msra.mxu0 0
    %2790 = vmatprep.subr.bf16.mxu0 0
    %2791 = vmatpush1.bf16.msra.mxu0 0
    %2792 = vmatprep.subr.bf16.mxu0 0
    %2793 = vmatpush1.bf16.msra.mxu0 0
    %2794 = vmatprep.subr.bf16.mxu0 0
    %2795 = vmatpush1.bf16.msra.mxu0 0
    %2796 = vmatprep.subr.bf16.mxu0 0
    %2797 = vmatpush1.bf16.msra.mxu0 0
    %2798 = vmatprep.subr.bf16.mxu0 0
    %2799 = vmatpush1.bf16.msra.mxu0 0
    %2800 = vmatprep.mubr.bf16.mxu0 0
    %2801 = vmatmul.mubr.bf16.gmra.mrb[0].mxu0 %v2766
    %v2802 = vpop.f32.mrb[0].mxu0
    %v2803 = vadd.f32 %v2739, %v2802
    %v2804 = vpop.f32.mrb[0].mxu0
    %v2805 = vpop.f32.mrb[0].mxu0
    %v2806 = vpop.f32.mrb[0].mxu0
    %2807 = vdwg.mxu0
    %v2808 = vmax.f32 %v2803, 0.0
    %s2809 = scalar_lea.vmem %s7, 1
    %v2810 = vld [vmem:[%s2809] sm:$0x1]
    %s2811 = scalar_lea.vmem %s8, 1
    %v2812 = vld [vmem:[%s2811] sm:$0x1]
    %v2813 = vsel %vm2580, %v2808, 0.0
    %2814 = vadd.xlane.f32.xlu0 %v2813
    %v2815 = vpop.xlane.xlu0 %2814
    %v2816 = vmul.f32 %v2815, %v2584
    %v2817 = vsub.f32 %v2808, %v2816
    %v2818 = vmul.f32 %v2817, %v2817
    %v2819 = vsel %vm2580, %v2818, 0.0
    %2820 = vadd.xlane.f32.xlu0 %v2819
    %v2821 = vpop.xlane.xlu0 %2820
    %v2822 = vmul.f32 %v2821, %v2584
    %v2823 = vadd.f32 %v2822, 1e-05
    %v2824 = vrsqrt.pop %v2823
    %v2825 = vmul.f32 %v2817, %v2824
    %v2827 = vlaneseq
    %v2828 = vshrl.u32 %v2827, 7
    %v2829 = vsub.s32 0, %v2828
    %v2830 = vrot.slane %v2810, %v2829
    %v2832 = vmul.f32 %v2825, %v2830
    %v2834 = vlaneseq
    %v2835 = vshrl.u32 %v2834, 7
    %v2836 = vsub.s32 0, %v2835
    %v2837 = vrot.slane %v2812, %v2836
    %v2839 = vadd.f32 %v2832, %v2837
    %2840 = vst.msk [vmem:[#allocation8] sm:$0x3] %vm2580, %v2839
    // Predicated region
    $region50: #{tpu_custom_call.1} parent=1 // pred_check
      _
    $region51: #{tpu_custom_call.1} parent=1 // pred_check_branch
      %2842 = sbr.rel (0) target = $region53
    $region52: #{tpu_custom_call.1} parent=1 // pred_region
      %s2844 = ssub.s32 32, 32
      %2845 = vsyncadd [#allocation4], %s2844
      %s2847 = sshll.u32 [#allocation8], 4
      %s2848 = int_to_ptr.vmem [resolvable:$true] %s2847
      %2850 = dma.vmem_to_hbm [thread:$0]  %s2848, 32, %s9, [#allocation4]
    $region53: #{tpu_custom_call.1} parent=1 // pred_fallthru
      _
    // Predicated region
    $region54: #{tpu_custom_call.1} parent=1 // pred_check
      _
    $region55: #{tpu_custom_call.1} parent=1 // pred_check_branch
      %2852 = sbr.rel (0) target = $region57
    $region56: #{tpu_custom_call.1} parent=1 // pred_region
      %2853 = dma.done [#allocation4], 32
    $region57: #{tpu_custom_call.1} parent=1 // pred_fallthru
      _
    %2854 = vsyncpa [#allocation3], 1
    %2855 = vsyncpa [#allocation6], 1
    %2856 = vsyncpa [#allocation4], 1

</llo_original>
